<compile_context>
chip_gen: v5e
topology: v5e:2x2
jax: 0.10.0
libtpu: 0.0.40
codegen_flags: <defaults>
</compile_context>

<pallas_src>
import math

import jax
import jax.numpy as jnp
from jax.experimental import pallas as pl
from jax.experimental.pallas import tpu as pltpu

# ---- scaled-down "bert-base"-style config (synthetic) ----
BATCH = 2
SEQ = 8
HIDDEN = 128            # stands in for 768
NUM_HEADS = 4           # stands in for 12
HEAD_DIM = HIDDEN // NUM_HEADS
INTERMEDIATE = 4 * HIDDEN
NUM_LAYERS = 2          # stands in for 12
VOCAB = 64
TYPE_VOCAB = 2
MAX_POS = 16
LN_EPS = 1e-12
NEG_BIG = -10000.0      # classic BERT additive-mask value
ATT_SCALE = 1.0 / math.sqrt(HEAD_DIM)

TOKENS = BATCH * SEQ            # M dimension of every projection matmul
GROUPS = NUM_HEADS * BATCH      # batch dim of the attention einsums


# --------------------------- kernel helpers ---------------------------------
def _layer_norm(x, g, b):
    mu = jnp.mean(x, axis=-1, keepdims=True)
    var = jnp.mean(jnp.square(x - mu), axis=-1, keepdims=True)
    return (x - mu) * jax.lax.rsqrt(var + LN_EPS) * g + b


def _bf16(x):
    return x.astype(jnp.bfloat16)


# ------------------------------ fused encoder kernel -------------------------
def fused_encoder_kernel(emb_ref, bias_ref, embln_ref,
                         wqkv_ref, wo_ref, w1_ref, w2_ref,
                         bqkv_ref, b1_ref, vec_ref,
                         out_ref):
    """One layer per grid step; grid = (NUM_LAYERS,) ("arbitrary").

    out_ref's block index is constant across the grid, so the whole (B*S, H)
    residual stream stays resident in VMEM for every layer and is written back
    to HBM exactly once.  Per-layer weights stream/double-buffer in.
    """
    B, S, H, NH, DH = BATCH, SEQ, HIDDEN, NUM_HEADS, HEAD_DIM
    layer = pl.program_id(0)

    # Embedding LayerNorm once, on the first layer step.
    @pl.when(layer == 0)
    def _():
        embln = embln_ref[...]                                  # (2, H)
        out_ref[...] = _layer_norm(emb_ref[...], embln[0:1, :], embln[1:2, :])

    x = out_ref[...]                                            # (T, H) f32, resident
    xb = _bf16(x)

    vecs = vec_ref[0]                                           # (6, H) packed small params
    bo, ln1_g, ln1_b = vecs[0:1, :], vecs[1:2, :], vecs[2:3, :]
    b2, ln2_g, ln2_b = vecs[3:4, :], vecs[4:5, :], vecs[5:6, :]

    # ---- fused QKV projection: single (T,H)@(H,3H) matmul -------------------
    # Weight columns are [Q | K | V], each head-blocked (head n -> cols n*DH..);
    # ATT_SCALE is folded into the Q columns at init time.
    qkv = jnp.dot(xb, wqkv_ref[0],
                  preferred_element_type=jnp.float32) + bqkv_ref[0]   # (T, 3H) f32

    def heads_of(block):
        # block in {0: Q, 1: K, 2: V}; returns (G, S, DH) with g = n*B + b.
        base = block * H
        parts = [qkv[:, base + n * DH: base + (n + 1) * DH].reshape(B, S, DH)
                 for n in range(NH)]
        return _bf16(jnp.concatenate(parts, axis=0))            # (NH*B, S, DH)

    q_g, k_g, v_g = heads_of(0), heads_of(1), heads_of(2)

    # ---- attention scores (mask bias precomputed in the wrapper) ------------
    scores = jnp.einsum("gsd,gtd->gst", q_g, k_g,
                        preferred_element_type=jnp.float32)     # (G, S, S)
    scores = scores + bias_ref[...]                             # (G, 1, S) additive mask

    # softmax with deferred normalization; reciprocal goes to the EUP slot
    m = jnp.max(scores, axis=-1, keepdims=True)
    e = jnp.exp(scores - m)
    denom = jnp.sum(e, axis=-1, keepdims=True)
    ctx = jnp.einsum("gst,gtd->gsd", _bf16(e), v_g,
                     preferred_element_type=jnp.float32)        # (G, S, DH)
    ctx = ctx * pl.reciprocal(denom, approx=True)               # normalize small tensor

    # ---- output projection: lane-concat heads, one dense K=H contraction ----
    heads_cat = jnp.concatenate(
        [ctx[n * B:(n + 1) * B].reshape(TOKENS, DH) for n in range(NH)],
        axis=-1)                                                # (T, H) f32
    attn = jnp.dot(_bf16(heads_cat), wo_ref[0],
                   preferred_element_type=jnp.float32) + bo     # (T, H)

    h1 = _layer_norm(x + attn, ln1_g, ln1_b)

    # ---- feed-forward --------------------------------------------------------
    ff = jnp.dot(_bf16(h1), w1_ref[0],
                 preferred_element_type=jnp.float32) + b1_ref[0]
    # TODO(synk): HF BERT uses exact erf-based GELU; tanh approximation here.
    ff = jax.nn.gelu(ff, approximate=True)
    ff = jnp.dot(_bf16(ff), w2_ref[0],
                 preferred_element_type=jnp.float32) + b2
    h2 = _layer_norm(h1 + ff, ln2_g, ln2_b)

    out_ref[...] = h2


# ------------------------------ wrapper ---------------------------------------
def fused_encoder(emb2d, bias_g, params):
    T, H = emb2d.shape
    G, _, S = bias_g.shape
    L, I = NUM_LAYERS, INTERMEDIATE

    def resident(shape):
        n = len(shape)
        return pl.BlockSpec(shape, lambda l, n=n: (0,) * n)

    def per_layer(shape):
        n = len(shape)
        return pl.BlockSpec((1,) + shape, lambda l, n=n: (l,) + (0,) * n)

    in_specs = [
        resident((T, H)),          # embeddings (used only at layer 0)
        resident((G, 1, S)),       # additive attention mask bias
                                   # (lane-sparse at toy S=8; dense at real S)
        resident((2, H)),          # embedding LN gamma/beta
        per_layer((H, 3 * H)),     # fused QKV weight
        per_layer((H, H)),         # output projection weight
        per_layer((H, I)),         # FFN in
        per_layer((I, H)),         # FFN out
        per_layer((1, 3 * H)),     # fused QKV bias (lane-dense)
        per_layer((1, I)),         # FFN-in bias
        per_layer((6, H)),         # packed [bo, ln1_g, ln1_b, b2, ln2_g, ln2_b]
    ]

    # NOTE: on v7x one could add a leading parallel grid axis of size 2 (the two
    # TensorCores) with half the batch per core; on v5e/v6e (1 TC) a parallel
    # batch axis only multiplies weight DMA traffic, so batch stays in-block.
    # At real-BERT shapes re-budget vmem_limit_bytes for the double-buffered
    # per-layer weight set (~27 MiB bf16): fine on v6e (128 MiB), needs the
    # explicit raise on v5e (16 MiB default scoped) and is tight on v7x (64 MiB
    # physical) — there, split w1/w2 along INTERMEDIATE or reduce buffering.
    return pl.pallas_call(
        fused_encoder_kernel,
        out_shape=jax.ShapeDtypeStruct((T, H), jnp.float32),
        grid=(L,),                            # layer axis only
        in_specs=in_specs,
        out_specs=resident((T, H)),           # resident across all layers
        compiler_params=pltpu.CompilerParams(
            dimension_semantics=("arbitrary",),
            vmem_limit_bytes=32 * 1024 * 1024),
    )(emb2d, bias_g,
      params["emb_ln"],
      params["wqkv"], params["wo"], params["w1"], params["w2"],
      params["bqkv"], params["b1"], params["vecs"])


# --------------------------- parameter init -----------------------------------
def init_params(key):
    def normal(k, shape, scale=0.02):
        return scale * jax.random.normal(k, shape, dtype=jnp.float32)

    H, NH, DH, I, L = HIDDEN, NUM_HEADS, HEAD_DIM, INTERMEDIATE, NUM_LAYERS
    bf = jnp.bfloat16
    ks = iter(jax.random.split(key, 12))

    # Fused QKV weight, columns [Q | K | V]; within each block, head n occupies
    # columns n*DH:(n+1)*DH.  ATT_SCALE is folded into the Q columns (and would
    # be folded into the Q bias slice if it were non-zero).
    wqkv = normal(next(ks), (L, H, 3 * H))
    wqkv = wqkv.at[:, :, :H].multiply(ATT_SCALE)

    # Packed small per-layer params: rows [bo, ln1_g, ln1_b, b2, ln2_g, ln2_b].
    vecs = jnp.zeros((L, 6, H), jnp.float32)
    vecs = vecs.at[:, 1].set(1.0).at[:, 4].set(1.0)   # LN gammas = 1

    params = {
        "word_emb": normal(next(ks), (VOCAB, H)),
        "pos_emb": normal(next(ks), (MAX_POS, H)),
        "type_emb": normal(next(ks), (TYPE_VOCAB, H)),
        "emb_ln": jnp.concatenate([jnp.ones((1, H), jnp.float32),
                                   jnp.zeros((1, H), jnp.float32)], axis=0),
        # Encoder weights stacked over layers; MXU operands stored bf16.
        "wqkv": wqkv.astype(bf),
        "bqkv": jnp.zeros((L, 1, 3 * H), jnp.float32),
        # Dense output projection: rows head-major, i.e. rows n*DH:(n+1)*DH act
        # on head n's context (== concat(heads) @ Wo of the reference model).
        "wo": normal(next(ks), (L, H, H)).astype(bf),
        "w1": normal(next(ks), (L, H, I)).astype(bf),
        "b1": jnp.zeros((L, 1, I), jnp.float32),
        "w2": normal(next(ks), (L, I, H)).astype(bf),
        "vecs": vecs,
        # nn.Linear(2H, 1): stored as (2H, 1) == PyTorch weight (1, 2H) transposed.
        "linear_w": normal(next(ks), (2 * H, 1)),
        "linear_b": jnp.zeros((1,), jnp.float32),
        # NOTE: self._out = nn.Linear(hidden_size, 1) is never used in forward().
    }
    return params


# ------------------------------ forward ---------------------------------------
def bert_concat_forward(params, source, mask, token_type, pos, status="train"):
    B, S = source.shape
    H, NH = HIDDEN, NUM_HEADS

    # Embedding lookups are gathers (glue); all heavy compute runs in the
    # single fused Pallas encoder kernel (embedding LN + every encoder layer).
    emb = (params["word_emb"][source]
           + params["pos_emb"][:S][None, :, :]
           + params["type_emb"][token_type])                    # (B, S, H)
    emb2d = emb.reshape(B * S, H)

    # Additive attention-mask bias, precomputed once (hoisted out of the
    # per-layer kernel body).  Shape (NH*B, 1, S) with g = n*B + b ordering.
    bias = (1.0 - mask.astype(jnp.float32)) * NEG_BIG           # (B, S)
    bias_g = jnp.broadcast_to(bias[None, :, None, :],
                              (NH, B, 1, S)).reshape(NH * B, 1, S)

    hidden = fused_encoder(emb2d, bias_g, params).reshape(B, S, H)

    # ---- concat head, faithful to the reference forward ---------------------
    # The reference 'train' branch writes every iteration's concat into ROW 0
    # of a zeros tensor, so only the last batch element's (CLS, pos-token)
    # features survive at row 0; the other rows stay zero.
    # TODO(synk): reference almost certainly intended new_hidden[i] = cat(...);
    # kept as written to preserve forward-pass semantics.
    if status == "train":
        new_hidden = jnp.zeros((B, 2 * H), jnp.float32)
        for i in range(B):                      # small static batch, mirrors the loop
            feat = jnp.concatenate([hidden[i, 0, :], hidden[i, pos[i], :]])
            new_hidden = new_hidden.at[0].set(feat)
    else:
        new_hidden = jnp.concatenate([hidden[0, 0, :], hidden[0, pos[0], :]])

    # Final Linear(2H, 1): lane-width-1 output -> plain JAX (a Pallas kernel
    # here would be pure launch/DMA overhead).
    return new_hidden @ params["linear_w"] + params["linear_b"]


if __name__ == "__main__":
    key = jax.random.PRNGKey(0)
    pkey, skey, tkey = jax.random.split(key, 3)

    params = init_params(pkey)
    source = jax.random.randint(skey, (BATCH, SEQ), 0, VOCAB, dtype=jnp.int32)
    token_type = jax.random.randint(tkey, (BATCH, SEQ), 0, TYPE_VOCAB, dtype=jnp.int32)
    mask = jnp.ones((BATCH, SEQ), jnp.int32).at[1, SEQ - 2:].set(0)  # pad last 2 of batch 1
    pos = jnp.array([3, 5], dtype=jnp.int32)        # positions concatenated with CLS

    out = bert_concat_forward(params, source, mask, token_type, pos, status="train")
    out = jax.block_until_ready(out)
    assert out.shape == (BATCH, 1) and out.dtype == jnp.float32
    assert bool(jnp.all(jnp.isfinite(out)))
    print("KERNEL_OK")
</pallas_src>

<mosaic_0001>
module attributes {stable_mosaic.version = 11 : i64} {
  func.func @fused_encoder_kernel(%arg0: i32, %arg1: memref<16x128xf32, #tpu.memory_space<vmem>>, %arg2: memref<8x1x8xf32, #tpu.memory_space<vmem>>, %arg3: memref<2x128xf32, #tpu.memory_space<vmem>>, %arg4: memref<1x128x384xbf16, #tpu.memory_space<vmem>>, %arg5: memref<1x128x128xbf16, #tpu.memory_space<vmem>>, %arg6: memref<1x128x512xbf16, #tpu.memory_space<vmem>>, %arg7: memref<1x512x128xbf16, #tpu.memory_space<vmem>>, %arg8: memref<1x1x384xf32, #tpu.memory_space<vmem>>, %arg9: memref<1x1x512xf32, #tpu.memory_space<vmem>>, %arg10: memref<1x6x128xf32, #tpu.memory_space<vmem>>, %arg11: memref<16x128xf32, #tpu.memory_space<vmem>>) attributes {dimension_semantics = [#tpu.dimension_semantics<arbitrary>], iteration_bounds = array<i64: 2>, scalar_prefetch = 0 : i64, scratch_operands = 0 : i64, tpu.core_type = #tpu.core_type<tc>, window_params = [{pipeline_mode = #tpu.pipeline_mode<synchronous>, transform_indices = @transform_0, window_bounds = array<i64: 16, 128>}, {pipeline_mode = #tpu.pipeline_mode<synchronous>, transform_indices = @transform_1, window_bounds = array<i64: 8, 1, 8>}, {pipeline_mode = #tpu.pipeline_mode<synchronous>, transform_indices = @transform_2, window_bounds = array<i64: 2, 128>}, {transform_indices = @transform_3, window_bounds = array<i64: 1, 128, 384>}, {transform_indices = @transform_4, window_bounds = array<i64: 1, 128, 128>}, {transform_indices = @transform_5, window_bounds = array<i64: 1, 128, 512>}, {transform_indices = @transform_6, window_bounds = array<i64: 1, 512, 128>}, {transform_indices = @transform_7, window_bounds = array<i64: 1, 1, 384>}, {transform_indices = @transform_8, window_bounds = array<i64: 1, 1, 512>}, {transform_indices = @transform_9, window_bounds = array<i64: 1, 6, 128>}, {pipeline_mode = #tpu.pipeline_mode<synchronous>, transform_indices = @transform_10, window_bounds = array<i64: 16, 128>}]} {
    %c0_i32 = arith.constant 0 : i32
    %0 = arith.cmpi eq, %arg0, %c0_i32 : i32
    %1 = arith.extui %0 : i1 to i32
    %c0_i32_0 = arith.constant 0 : i32
    %2 = arith.cmpi ne, %1, %c0_i32_0 : i32
    scf.if %2 {
      %c0_49 = arith.constant 0 : index
      %c0_50 = arith.constant 0 : index
      %155 = vector.load %arg3[%c0_49, %c0_50] : memref<2x128xf32, #tpu.memory_space<vmem>>, vector<2x128xf32>
      %c0_51 = arith.constant 0 : index
      %c0_52 = arith.constant 0 : index
      %156 = vector.load %arg1[%c0_51, %c0_52] : memref<16x128xf32, #tpu.memory_space<vmem>>, vector<16x128xf32>
      %157 = vector.extract_strided_slice %155 {offsets = [0, 0], sizes = [1, 128], strides = [1, 1]} : vector<2x128xf32> to vector<1x128xf32>
      %158 = vector.extract_strided_slice %155 {offsets = [1, 0], sizes = [1, 128], strides = [1, 1]} : vector<2x128xf32> to vector<1x128xf32>
      %cst_53 = arith.constant dense<0.000000e+00> : vector<16xf32>
      %159 = vector.multi_reduction <add>, %156, %cst_53 [1] : vector<16x128xf32> to vector<16xf32>
      %160 = vector.shape_cast %159 : vector<16xf32> to vector<16x1xf32>
      %cst_54 = arith.constant 1.280000e+02 : f32
      %161 = vector.broadcast %cst_54 : f32 to vector<16x1xf32>
      %162 = arith.divf %160, %161 : vector<16x1xf32>
      %163 = vector.broadcast %162 : vector<16x1xf32> to vector<16x128xf32>
      %164 = arith.subf %156, %163 : vector<16x128xf32>
      %165 = arith.mulf %164, %164 : vector<16x128xf32>
      %cst_55 = arith.constant dense<0.000000e+00> : vector<16xf32>
      %166 = vector.multi_reduction <add>, %165, %cst_55 [1] : vector<16x128xf32> to vector<16xf32>
      %167 = vector.shape_cast %166 : vector<16xf32> to vector<16x1xf32>
      %cst_56 = arith.constant 1.280000e+02 : f32
      %168 = vector.broadcast %cst_56 : f32 to vector<16x1xf32>
      %169 = arith.divf %167, %168 : vector<16x1xf32>
      %170 = vector.broadcast %162 : vector<16x1xf32> to vector<16x128xf32>
      %171 = arith.subf %156, %170 : vector<16x128xf32>
      %cst_57 = arith.constant 9.99999996E-13 : f32
      %172 = vector.broadcast %cst_57 : f32 to vector<16x1xf32>
      %173 = arith.addf %169, %172 : vector<16x1xf32>
      %174 = math.rsqrt %173 : vector<16x1xf32>
      %175 = vector.broadcast %174 : vector<16x1xf32> to vector<16x128xf32>
      %176 = arith.mulf %171, %175 : vector<16x128xf32>
      %177 = vector.broadcast %157 : vector<1x128xf32> to vector<16x128xf32>
      %178 = arith.mulf %176, %177 : vector<16x128xf32>
      %179 = vector.broadcast %158 : vector<1x128xf32> to vector<16x128xf32>
      %180 = arith.addf %178, %179 : vector<16x128xf32>
      %c0_58 = arith.constant 0 : index
      %c0_59 = arith.constant 0 : index
      %181 = vector.load %arg11[%c0_58, %c0_59] : memref<16x128xf32, #tpu.memory_space<vmem>>, vector<16x128xf32>
      tpu.vector_store %arg11[%c0_58, %c0_59], %180 {strides = array<i32>} : memref<16x128xf32, #tpu.memory_space<vmem>>, vector<16x128xf32>,
    } else {
    }
    %c0 = arith.constant 0 : index
    %c0_1 = arith.constant 0 : index
    %3 = vector.load %arg11[%c0, %c0_1] : memref<16x128xf32, #tpu.memory_space<vmem>>, vector<16x128xf32>
    %4 = arith.truncf %3 : vector<16x128xf32> to vector<16x128xbf16>
    %c0_2 = arith.constant 0 : index
    %c0_3 = arith.constant 0 : index
    %c0_4 = arith.constant 0 : index
    %5 = vector.load %arg10[%c0_2, %c0_3, %c0_4] : memref<1x6x128xf32, #tpu.memory_space<vmem>>, vector<1x6x128xf32>
    %6 = vector.shape_cast %5 : vector<1x6x128xf32> to vector<6x128xf32>
    %7 = vector.extract_strided_slice %6 {offsets = [0, 0], sizes = [1, 128], strides = [1, 1]} : vector<6x128xf32> to vector<1x128xf32>
    %8 = vector.extract_strided_slice %6 {offsets = [1, 0], sizes = [1, 128], strides = [1, 1]} : vector<6x128xf32> to vector<1x128xf32>
    %9 = vector.extract_strided_slice %6 {offsets = [2, 0], sizes = [1, 128], strides = [1, 1]} : vector<6x128xf32> to vector<1x128xf32>
    %10 = vector.extract_strided_slice %6 {offsets = [3, 0], sizes = [1, 128], strides = [1, 1]} : vector<6x128xf32> to vector<1x128xf32>
    %11 = vector.extract_strided_slice %6 {offsets = [4, 0], sizes = [1, 128], strides = [1, 1]} : vector<6x128xf32> to vector<1x128xf32>
    %12 = vector.extract_strided_slice %6 {offsets = [5, 0], sizes = [1, 128], strides = [1, 1]} : vector<6x128xf32> to vector<1x128xf32>
    %c0_5 = arith.constant 0 : index
    %c0_6 = arith.constant 0 : index
    %c0_7 = arith.constant 0 : index
    %13 = vector.load %arg4[%c0_5, %c0_6, %c0_7] : memref<1x128x384xbf16, #tpu.memory_space<vmem>>, vector<1x128x384xbf16>
    %14 = vector.shape_cast %13 : vector<1x128x384xbf16> to vector<128x384xbf16>
    %cst = arith.constant dense<0.000000e+00> : vector<16x384xf32>
    %15 = tpu.matmul %4, %14, %cst {dimension_numbers = #tpu.dot_dimension_numbers<[1], [0], [0], [1], [0, 0, 1, 1], [], []>} : vector<16x128xbf16>, vector<128x384xbf16>, vector<16x384xf32> -> vector<16x384xf32>
    %c0_8 = arith.constant 0 : index
    %c0_9 = arith.constant 0 : index
    %c0_10 = arith.constant 0 : index
    %16 = vector.load %arg8[%c0_8, %c0_9, %c0_10] : memref<1x1x384xf32, #tpu.memory_space<vmem>>, vector<1x1x384xf32>
    %17 = vector.shape_cast %16 : vector<1x1x384xf32> to vector<1x384xf32>
    %18 = vector.broadcast %17 : vector<1x384xf32> to vector<16x384xf32>
    %19 = arith.addf %15, %18 : vector<16x384xf32>
    %20 = vector.extract_strided_slice %19 {offsets = [0, 0], sizes = [16, 32], strides = [1, 1]} : vector<16x384xf32> to vector<16x32xf32>
    %21 = vector.shape_cast %20 : vector<16x32xf32> to vector<2x8x32xf32>
    %22 = vector.extract_strided_slice %19 {offsets = [0, 32], sizes = [16, 32], strides = [1, 1]} : vector<16x384xf32> to vector<16x32xf32>
    %23 = vector.shape_cast %22 : vector<16x32xf32> to vector<2x8x32xf32>
    %24 = vector.extract_strided_slice %19 {offsets = [0, 64], sizes = [16, 32], strides = [1, 1]} : vector<16x384xf32> to vector<16x32xf32>
    %25 = vector.shape_cast %24 : vector<16x32xf32> to vector<2x8x32xf32>
    %26 = vector.extract_strided_slice %19 {offsets = [0, 96], sizes = [16, 32], strides = [1, 1]} : vector<16x384xf32> to vector<16x32xf32>
    %27 = vector.shape_cast %26 : vector<16x32xf32> to vector<2x8x32xf32>
    %28 = tpu.concatenate %21, %23, %25, %27 in 0 : vector<2x8x32xf32>, vector<2x8x32xf32>, vector<2x8x32xf32>, vector<2x8x32xf32> -> vector<8x8x32xf32>
    %29 = arith.truncf %28 : vector<8x8x32xf32> to vector<8x8x32xbf16>
    %30 = vector.extract_strided_slice %19 {offsets = [0, 128], sizes = [16, 32], strides = [1, 1]} : vector<16x384xf32> to vector<16x32xf32>
    %31 = vector.shape_cast %30 : vector<16x32xf32> to vector<2x8x32xf32>
    %32 = vector.extract_strided_slice %19 {offsets = [0, 160], sizes = [16, 32], strides = [1, 1]} : vector<16x384xf32> to vector<16x32xf32>
    %33 = vector.shape_cast %32 : vector<16x32xf32> to vector<2x8x32xf32>
    %34 = vector.extract_strided_slice %19 {offsets = [0, 192], sizes = [16, 32], strides = [1, 1]} : vector<16x384xf32> to vector<16x32xf32>
    %35 = vector.shape_cast %34 : vector<16x32xf32> to vector<2x8x32xf32>
    %36 = vector.extract_strided_slice %19 {offsets = [0, 224], sizes = [16, 32], strides = [1, 1]} : vector<16x384xf32> to vector<16x32xf32>
    %37 = vector.shape_cast %36 : vector<16x32xf32> to vector<2x8x32xf32>
    %38 = tpu.concatenate %31, %33, %35, %37 in 0 : vector<2x8x32xf32>, vector<2x8x32xf32>, vector<2x8x32xf32>, vector<2x8x32xf32> -> vector<8x8x32xf32>
    %39 = arith.truncf %38 : vector<8x8x32xf32> to vector<8x8x32xbf16>
    %40 = vector.extract_strided_slice %19 {offsets = [0, 256], sizes = [16, 32], strides = [1, 1]} : vector<16x384xf32> to vector<16x32xf32>
    %41 = vector.shape_cast %40 : vector<16x32xf32> to vector<2x8x32xf32>
    %42 = vector.extract_strided_slice %19 {offsets = [0, 288], sizes = [16, 32], strides = [1, 1]} : vector<16x384xf32> to vector<16x32xf32>
    %43 = vector.shape_cast %42 : vector<16x32xf32> to vector<2x8x32xf32>
    %44 = vector.extract_strided_slice %19 {offsets = [0, 320], sizes = [16, 32], strides = [1, 1]} : vector<16x384xf32> to vector<16x32xf32>
    %45 = vector.shape_cast %44 : vector<16x32xf32> to vector<2x8x32xf32>
    %46 = vector.extract_strided_slice %19 {offsets = [0, 352], sizes = [16, 32], strides = [1, 1]} : vector<16x384xf32> to vector<16x32xf32>
    %47 = vector.shape_cast %46 : vector<16x32xf32> to vector<2x8x32xf32>
    %48 = tpu.concatenate %41, %43, %45, %47 in 0 : vector<2x8x32xf32>, vector<2x8x32xf32>, vector<2x8x32xf32>, vector<2x8x32xf32> -> vector<8x8x32xf32>
    %49 = arith.truncf %48 : vector<8x8x32xf32> to vector<8x8x32xbf16>
    "tpu.trace_start"() <{level = 10 : i32, message = "gsd,gtd->gst"}> : () -> ()
    %cst_11 = arith.constant dense<0.000000e+00> : vector<8x8x8xf32>
    %50 = tpu.matmul %29, %39, %cst_11 {dimension_numbers = #tpu.dot_dimension_numbers<[2], [2], [1], [1], [0, 0, 0, 1, 1, 1], [0], [0]>} : vector<8x8x32xbf16>, vector<8x8x32xbf16>, vector<8x8x8xf32> -> vector<8x8x8xf32>
    "tpu.trace_stop"() : () -> ()
    %c0_12 = arith.constant 0 : index
    %c0_13 = arith.constant 0 : index
    %c0_14 = arith.constant 0 : index
    %51 = vector.load %arg2[%c0_12, %c0_13, %c0_14] : memref<8x1x8xf32, #tpu.memory_space<vmem>>, vector<8x1x8xf32>
    %52 = vector.broadcast %51 : vector<8x1x8xf32> to vector<8x8x8xf32>
    %53 = arith.addf %50, %52 : vector<8x8x8xf32>
    %cst_15 = arith.constant dense<0xFF800000> : vector<8x8xf32>
    %54 = vector.multi_reduction <maximumf>, %53, %cst_15 [2] : vector<8x8x8xf32> to vector<8x8xf32>
    %55 = vector.shape_cast %54 : vector<8x8xf32> to vector<8x8x1xf32>
    %56 = vector.broadcast %55 : vector<8x8x1xf32> to vector<8x8x8xf32>
    %57 = arith.subf %53, %56 : vector<8x8x8xf32>
    %58 = math.exp %57 : vector<8x8x8xf32>
    %cst_16 = arith.constant dense<0.000000e+00> : vector<8x8xf32>
    %59 = vector.multi_reduction <add>, %58, %cst_16 [2] : vector<8x8x8xf32> to vector<8x8xf32>
    %60 = vector.shape_cast %59 : vector<8x8xf32> to vector<8x8x1xf32>
    %61 = arith.truncf %58 : vector<8x8x8xf32> to vector<8x8x8xbf16>
    "tpu.trace_start"() <{level = 10 : i32, message = "gst,gtd->gsd"}> : () -> ()
    %cst_17 = arith.constant dense<0.000000e+00> : vector<8x8x32xf32>
    %62 = tpu.matmul %61, %49, %cst_17 {dimension_numbers = #tpu.dot_dimension_numbers<[2], [1], [1], [2], [0, 0, 0, 1, 1, 2], [0], [0]>} : vector<8x8x8xbf16>, vector<8x8x32xbf16>, vector<8x8x32xf32> -> vector<8x8x32xf32>
    "tpu.trace_stop"() : () -> ()
    %63 = tpu.reciprocal %60 {approx = true} : vector<8x8x1xf32> -> vector<8x8x1xf32>
    %64 = vector.broadcast %63 : vector<8x8x1xf32> to vector<8x8x32xf32>
    %65 = arith.mulf %62, %64 : vector<8x8x32xf32>
    %66 = vector.extract_strided_slice %65 {offsets = [0, 0, 0], sizes = [2, 8, 32], strides = [1, 1, 1]} : vector<8x8x32xf32> to vector<2x8x32xf32>
    %67 = vector.shape_cast %66 : vector<2x8x32xf32> to vector<16x32xf32>
    %68 = vector.extract_strided_slice %65 {offsets = [2, 0, 0], sizes = [2, 8, 32], strides = [1, 1, 1]} : vector<8x8x32xf32> to vector<2x8x32xf32>
    %69 = vector.shape_cast %68 : vector<2x8x32xf32> to vector<16x32xf32>
    %70 = vector.extract_strided_slice %65 {offsets = [4, 0, 0], sizes = [2, 8, 32], strides = [1, 1, 1]} : vector<8x8x32xf32> to vector<2x8x32xf32>
    %71 = vector.shape_cast %70 : vector<2x8x32xf32> to vector<16x32xf32>
    %72 = vector.extract_strided_slice %65 {offsets = [6, 0, 0], sizes = [2, 8, 32], strides = [1, 1, 1]} : vector<8x8x32xf32> to vector<2x8x32xf32>
    %73 = vector.shape_cast %72 : vector<2x8x32xf32> to vector<16x32xf32>
    %74 = tpu.concatenate %67, %69, %71, %73 in 1 : vector<16x32xf32>, vector<16x32xf32>, vector<16x32xf32>, vector<16x32xf32> -> vector<16x128xf32>
    %75 = arith.truncf %74 : vector<16x128xf32> to vector<16x128xbf16>
    %c0_18 = arith.constant 0 : index
    %c0_19 = arith.constant 0 : index
    %c0_20 = arith.constant 0 : index
    %76 = vector.load %arg5[%c0_18, %c0_19, %c0_20] : memref<1x128x128xbf16, #tpu.memory_space<vmem>>, vector<1x128x128xbf16>
    %77 = vector.shape_cast %76 : vector<1x128x128xbf16> to vector<128x128xbf16>
    %cst_21 = arith.constant dense<0.000000e+00> : vector<16x128xf32>
    %78 = tpu.matmul %75, %77, %cst_21 {dimension_numbers = #tpu.dot_dimension_numbers<[1], [0], [0], [1], [0, 0, 1, 1], [], []>} : vector<16x128xbf16>, vector<128x128xbf16>, vector<16x128xf32> -> vector<16x128xf32>
    %79 = vector.broadcast %7 : vector<1x128xf32> to vector<16x128xf32>
    %80 = arith.addf %78, %79 : vector<16x128xf32>
    %81 = arith.addf %3, %80 : vector<16x128xf32>
    %cst_22 = arith.constant dense<0.000000e+00> : vector<16xf32>
    %82 = vector.multi_reduction <add>, %81, %cst_22 [1] : vector<16x128xf32> to vector<16xf32>
    %83 = vector.shape_cast %82 : vector<16xf32> to vector<16x1xf32>
    %cst_23 = arith.constant 1.280000e+02 : f32
    %84 = vector.broadcast %cst_23 : f32 to vector<16x1xf32>
    %85 = arith.divf %83, %84 : vector<16x1xf32>
    %86 = vector.broadcast %85 : vector<16x1xf32> to vector<16x128xf32>
    %87 = arith.subf %81, %86 : vector<16x128xf32>
    %88 = arith.mulf %87, %87 : vector<16x128xf32>
    %cst_24 = arith.constant dense<0.000000e+00> : vector<16xf32>
    %89 = vector.multi_reduction <add>, %88, %cst_24 [1] : vector<16x128xf32> to vector<16xf32>
    %90 = vector.shape_cast %89 : vector<16xf32> to vector<16x1xf32>
    %cst_25 = arith.constant 1.280000e+02 : f32
    %91 = vector.broadcast %cst_25 : f32 to vector<16x1xf32>
    %92 = arith.divf %90, %91 : vector<16x1xf32>
    %93 = vector.broadcast %85 : vector<16x1xf32> to vector<16x128xf32>
    %94 = arith.subf %81, %93 : vector<16x128xf32>
    %cst_26 = arith.constant 9.99999996E-13 : f32
    %95 = vector.broadcast %cst_26 : f32 to vector<16x1xf32>
    %96 = arith.addf %92, %95 : vector<16x1xf32>
    %97 = math.rsqrt %96 : vector<16x1xf32>
    %98 = vector.broadcast %97 : vector<16x1xf32> to vector<16x128xf32>
    %99 = arith.mulf %94, %98 : vector<16x128xf32>
    %100 = vector.broadcast %8 : vector<1x128xf32> to vector<16x128xf32>
    %101 = arith.mulf %99, %100 : vector<16x128xf32>
    %102 = vector.broadcast %9 : vector<1x128xf32> to vector<16x128xf32>
    %103 = arith.addf %101, %102 : vector<16x128xf32>
    %104 = arith.truncf %103 : vector<16x128xf32> to vector<16x128xbf16>
    %c0_27 = arith.constant 0 : index
    %c0_28 = arith.constant 0 : index
    %c0_29 = arith.constant 0 : index
    %105 = vector.load %arg6[%c0_27, %c0_28, %c0_29] : memref<1x128x512xbf16, #tpu.memory_space<vmem>>, vector<1x128x512xbf16>
    %106 = vector.shape_cast %105 : vector<1x128x512xbf16> to vector<128x512xbf16>
    %cst_30 = arith.constant dense<0.000000e+00> : vector<16x512xf32>
    %107 = tpu.matmul %104, %106, %cst_30 {dimension_numbers = #tpu.dot_dimension_numbers<[1], [0], [0], [1], [0, 0, 1, 1], [], []>} : vector<16x128xbf16>, vector<128x512xbf16>, vector<16x512xf32> -> vector<16x512xf32>
    %c0_31 = arith.constant 0 : index
    %c0_32 = arith.constant 0 : index
    %c0_33 = arith.constant 0 : index
    %108 = vector.load %arg9[%c0_31, %c0_32, %c0_33] : memref<1x1x512xf32, #tpu.memory_space<vmem>>, vector<1x1x512xf32>
    %109 = vector.shape_cast %108 : vector<1x1x512xf32> to vector<1x512xf32>
    %110 = vector.broadcast %109 : vector<1x512xf32> to vector<16x512xf32>
    %111 = arith.addf %107, %110 : vector<16x512xf32>
    %112 = arith.mulf %111, %111 : vector<16x512xf32>
    %113 = arith.mulf %111, %112 : vector<16x512xf32>
    %cst_34 = arith.constant 4.471500e-02 : f32
    %114 = vector.broadcast %cst_34 : f32 to vector<16x512xf32>
    %115 = arith.mulf %114, %113 : vector<16x512xf32>
    %116 = arith.addf %111, %115 : vector<16x512xf32>
    %cst_35 = arith.constant 0.797884583 : f32
    %117 = vector.broadcast %cst_35 : f32 to vector<16x512xf32>
    %118 = arith.mulf %117, %116 : vector<16x512xf32>
    %119 = math.tanh %118 : vector<16x512xf32>
    %cst_36 = arith.constant 1.000000e+00 : f32
    %120 = vector.broadcast %cst_36 : f32 to vector<16x512xf32>
    %121 = arith.addf %120, %119 : vector<16x512xf32>
    %cst_37 = arith.constant 5.000000e-01 : f32
    %122 = vector.broadcast %cst_37 : f32 to vector<16x512xf32>
    %123 = arith.mulf %122, %121 : vector<16x512xf32>
    %124 = arith.mulf %111, %123 : vector<16x512xf32>
    %125 = arith.truncf %124 : vector<16x512xf32> to vector<16x512xbf16>
    %c0_38 = arith.constant 0 : index
    %c0_39 = arith.constant 0 : index
    %c0_40 = arith.constant 0 : index
    %126 = vector.load %arg7[%c0_38, %c0_39, %c0_40] : memref<1x512x128xbf16, #tpu.memory_space<vmem>>, vector<1x512x128xbf16>
    %127 = vector.shape_cast %126 : vector<1x512x128xbf16> to vector<512x128xbf16>
    %cst_41 = arith.constant dense<0.000000e+00> : vector<16x128xf32>
    %128 = tpu.matmul %125, %127, %cst_41 {dimension_numbers = #tpu.dot_dimension_numbers<[1], [0], [0], [1], [0, 0, 1, 1], [], []>} : vector<16x512xbf16>, vector<512x128xbf16>, vector<16x128xf32> -> vector<16x128xf32>
    %129 = vector.broadcast %10 : vector<1x128xf32> to vector<16x128xf32>
    %130 = arith.addf %128, %129 : vector<16x128xf32>
    %131 = arith.addf %103, %130 : vector<16x128xf32>
    %cst_42 = arith.constant dense<0.000000e+00> : vector<16xf32>
    %132 = vector.multi_reduction <add>, %131, %cst_42 [1] : vector<16x128xf32> to vector<16xf32>
    %133 = vector.shape_cast %132 : vector<16xf32> to vector<16x1xf32>
    %cst_43 = arith.constant 1.280000e+02 : f32
    %134 = vector.broadcast %cst_43 : f32 to vector<16x1xf32>
    %135 = arith.divf %133, %134 : vector<16x1xf32>
    %136 = vector.broadcast %135 : vector<16x1xf32> to vector<16x128xf32>
    %137 = arith.subf %131, %136 : vector<16x128xf32>
    %138 = arith.mulf %137, %137 : vector<16x128xf32>
    %cst_44 = arith.constant dense<0.000000e+00> : vector<16xf32>
    %139 = vector.multi_reduction <add>, %138, %cst_44 [1] : vector<16x128xf32> to vector<16xf32>
    %140 = vector.shape_cast %139 : vector<16xf32> to vector<16x1xf32>
    %cst_45 = arith.constant 1.280000e+02 : f32
    %141 = vector.broadcast %cst_45 : f32 to vector<16x1xf32>
    %142 = arith.divf %140, %141 : vector<16x1xf32>
    %143 = vector.broadcast %135 : vector<16x1xf32> to vector<16x128xf32>
    %144 = arith.subf %131, %143 : vector<16x128xf32>
    %cst_46 = arith.constant 9.99999996E-13 : f32
    %145 = vector.broadcast %cst_46 : f32 to vector<16x1xf32>
    %146 = arith.addf %142, %145 : vector<16x1xf32>
    %147 = math.rsqrt %146 : vector<16x1xf32>
    %148 = vector.broadcast %147 : vector<16x1xf32> to vector<16x128xf32>
    %149 = arith.mulf %144, %148 : vector<16x128xf32>
    %150 = vector.broadcast %11 : vector<1x128xf32> to vector<16x128xf32>
    %151 = arith.mulf %149, %150 : vector<16x128xf32>
    %152 = vector.broadcast %12 : vector<1x128xf32> to vector<16x128xf32>
    %153 = arith.addf %151, %152 : vector<16x128xf32>
    %c0_47 = arith.constant 0 : index
    %c0_48 = arith.constant 0 : index
    %154 = vector.load %arg11[%c0_47, %c0_48] : memref<16x128xf32, #tpu.memory_space<vmem>>, vector<16x128xf32>
    tpu.vector_store %arg11[%c0_47, %c0_48], %153 {strides = array<i32>} : memref<16x128xf32, #tpu.memory_space<vmem>>, vector<16x128xf32>,
    return
  }
  func.func @transform_0(%arg0: i32) -> (i32, i32) {
    %c0_i32 = arith.constant 0 : i32
    %c0_i32_0 = arith.constant 0 : i32
    %c0_i32_1 = arith.constant 0 : i32
    return %c0_i32, %c0_i32_0 : i32, i32
  }
  func.func @transform_1(%arg0: i32) -> (i32, i32, i32) {
    %c0_i32 = arith.constant 0 : i32
    %c0_i32_0 = arith.constant 0 : i32
    %c0_i32_1 = arith.constant 0 : i32
    %c0_i32_2 = arith.constant 0 : i32
    return %c0_i32, %c0_i32_0, %c0_i32_1 : i32, i32, i32
  }
  func.func @transform_2(%arg0: i32) -> (i32, i32) {
    %c0_i32 = arith.constant 0 : i32
    %c0_i32_0 = arith.constant 0 : i32
    %c0_i32_1 = arith.constant 0 : i32
    return %c0_i32, %c0_i32_0 : i32, i32
  }
  func.func @transform_3(%arg0: i32) -> (i32, i32, i32) {
    %c0_i32 = arith.constant 0 : i32
    %c0_i32_0 = arith.constant 0 : i32
    %c0_i32_1 = arith.constant 0 : i32
    return %arg0, %c0_i32, %c0_i32_0 : i32, i32, i32
  }
  func.func @transform_4(%arg0: i32) -> (i32, i32, i32) {
    %c0_i32 = arith.constant 0 : i32
    %c0_i32_0 = arith.constant 0 : i32
    %c0_i32_1 = arith.constant 0 : i32
    return %arg0, %c0_i32, %c0_i32_0 : i32, i32, i32
  }
  func.func @transform_5(%arg0: i32) -> (i32, i32, i32) {
    %c0_i32 = arith.constant 0 : i32
    %c0_i32_0 = arith.constant 0 : i32
    %c0_i32_1 = arith.constant 0 : i32
    return %arg0, %c0_i32, %c0_i32_0 : i32, i32, i32
  }
  func.func @transform_6(%arg0: i32) -> (i32, i32, i32) {
    %c0_i32 = arith.constant 0 : i32
    %c0_i32_0 = arith.constant 0 : i32
    %c0_i32_1 = arith.constant 0 : i32
    return %arg0, %c0_i32, %c0_i32_0 : i32, i32, i32
  }
  func.func @transform_7(%arg0: i32) -> (i32, i32, i32) {
    %c0_i32 = arith.constant 0 : i32
    %c0_i32_0 = arith.constant 0 : i32
    %c0_i32_1 = arith.constant 0 : i32
    return %arg0, %c0_i32, %c0_i32_0 : i32, i32, i32
  }
  func.func @transform_8(%arg0: i32) -> (i32, i32, i32) {
    %c0_i32 = arith.constant 0 : i32
    %c0_i32_0 = arith.constant 0 : i32
    %c0_i32_1 = arith.constant 0 : i32
    return %arg0, %c0_i32, %c0_i32_0 : i32, i32, i32
  }
  func.func @transform_9(%arg0: i32) -> (i32, i32, i32) {
    %c0_i32 = arith.constant 0 : i32
    %c0_i32_0 = arith.constant 0 : i32
    %c0_i32_1 = arith.constant 0 : i32
    return %arg0, %c0_i32, %c0_i32_0 : i32, i32, i32
  }
  func.func @transform_10(%arg0: i32) -> (i32, i32) {
    %c0_i32 = arith.constant 0 : i32
    %c0_i32_0 = arith.constant 0 : i32
    %c0_i32_1 = arith.constant 0 : i32
    return %c0_i32, %c0_i32_0 : i32, i32
  }
}

</mosaic_0001>

<llo_original>
// kernel: tpu_custom_call.1
$region0: #{tpu_custom_call.1}
  #allocation0 [shape = 'u32[]', space=smem, size = 0x4, offset = 0x4, fixed_abs, tag = 'smem constant byte address 0x4 - core index']
  #allocation1 [shape = 'u32[72,128]{1,0:T(1,128)}', space=vmem, size = 0x9000, scoped, tag = 'internal scratch']
  %s0 = inlined_call_operand.vmem [shape: f32[16,128], index: 0, kind: input, shape index: {}]
  %s1 = inlined_call_operand.vmem [shape: f32[8,1,8], index: 1, kind: input, shape index: {}]
  %s2 = inlined_call_operand.hbm [shape: f32[2,128], index: 2, kind: input, shape index: {}]
  %s3 = inlined_call_operand.hbm [shape: bf16[2,128,384], index: 3, kind: input, shape index: {}]
  %s4 = inlined_call_operand.hbm [shape: bf16[2,128,128], index: 4, kind: input, shape index: {}]
  %s5 = inlined_call_operand.hbm [shape: bf16[2,128,512], index: 5, kind: input, shape index: {}]
  %s6 = inlined_call_operand.hbm [shape: bf16[2,512,128], index: 6, kind: input, shape index: {}]
  %s7 = inlined_call_operand.hbm [shape: f32[2,1,384], index: 7, kind: input, shape index: {}]
  %s8 = inlined_call_operand.vmem [shape: f32[2,1,512], index: 8, kind: input, shape index: {}]
  %s9 = inlined_call_operand.vmem [shape: f32[2,6,128], index: 9, kind: input, shape index: {}]
  %s10 = inlined_call_operand.hbm [shape: f32[16,128], index: 10, kind: output, shape index: {}]
  %s11 = sld [smem:[#allocation0]]
  $region101: #{tpu_custom_call.1} parent=0
    _
  %s13 = ssub.s32 1, %s11
  %s14 = scalar_select 0, %s13, %s11
  $region1: #{tpu_custom_call.1} parent=0
    #allocation2 [shape = 'u8[1024]{0}', space=vmem, size = 0x400, scoped, tag = 'input window, operand 2, single buffered']
    #allocation3 [shape = 's32[2]{0}', space=sflag, size = 0x8, scoped, tag = 'scoped memory for tpu_custom_call.1']
    #allocation4 [shape = 's32[2]{0}', space=sflag, size = 0x8, scoped, tag = 'scoped memory for tpu_custom_call.1']
    #allocation5 [shape = 'u8[196608]{0}', space=vmem, size = 0x30000, scoped, tag = 'input window, operand 3']
    #allocation6 [shape = 's32[2]{0}', space=sflag, size = 0x8, scoped, tag = 'scoped memory for tpu_custom_call.1']
    #allocation7 [shape = 'u8[65536]{0}', space=vmem, size = 0x10000, scoped, tag = 'input window, operand 4']
    #allocation8 [shape = 'u8[262144]{0}', space=vmem, size = 0x40000, scoped, tag = 'input window, operand 5']
    #allocation9 [shape = 's32[2]{0}', space=sflag, size = 0x8, scoped, tag = 'scoped memory for tpu_custom_call.1']
    #allocation10 [shape = 'u8[262144]{0}', space=vmem, size = 0x40000, scoped, tag = 'input window, operand 6']
    #allocation11 [shape = 'u8[3072]{0}', space=vmem, size = 0xc00, scoped, tag = 'input window, operand 7']
    #allocation12 [shape = 's32[2]{0}', space=sflag, size = 0x8, scoped, tag = 'scoped memory for tpu_custom_call.1']
    #allocation13 [shape = 'u8[8192]{0}', space=vmem, size = 0x2000, scoped, tag = 'output window, operand 0, single buffered']
    %15 = vsyncpa [#allocation3], 0
    %16 = vsyncpa [#allocation6], 0
    %s17 = scalar_lea.sflag [#allocation6], 1
    %18 = vsyncpa %s17, 0
    %19 = vsyncpa [#allocation9], 0
    %s20 = scalar_lea.sflag [#allocation9], 1
    %21 = vsyncpa %s20, 0
    %22 = vsyncpa [#allocation12], 0
    %s23 = scalar_lea.sflag [#allocation12], 1
    %24 = vsyncpa %s23, 0
    %25 = vsyncpa [#allocation4], 0
    loop: start=0, step=1, limit=4
    $region2: #{tpu_custom_call.1} parent=1 // loop_pre_header
      _
    $region3: #{tpu_custom_call.1} parent=1 // loop_header
      %s27 = sphi 0, %s31
      %p28 = scmp.ge.s32.totalorder %s27, 4
      %s35 = sphi 0, %s35
      %s37 = sphi 0, %s35
      %s38 = sphi 0, %s37
      %s52 = sphi 0, %s38
      %s56 = sphi 0, %s56
      %s58 = sphi 0, %s56
      %s59 = sphi 0, %s58
      %s73 = sphi 0, %s59
      %s77 = sphi 0, %s77
      %s79 = sphi 0, %s77
      %s80 = sphi 0, %s79
      %s94 = sphi 0, %s80
      %s100 = sphi 0, %s102
      %s103 = sphi 0, %s100
      %s104 = sphi 0, %s103
      %s120 = sphi 0, %s104
      %s126 = sphi 0, %s128
      %s129 = sphi 0, %s126
      %s130 = sphi 0, %s129
      %s146 = sphi 0, %s130
      %s152 = sphi 0, %s154
      %s155 = sphi 0, %s152
      %s156 = sphi 0, %s155
      %s172 = sphi 0, %s156
      %s178 = sphi 0, %s180
      %s181 = sphi 0, %s178
      %s182 = sphi 0, %s181
      %s198 = sphi 0, %s182
      %s204 = sphi 0, %s206
      %s207 = sphi 0, %s204
      %s208 = sphi 0, %s207
      %s224 = sphi 0, %s208
      %s230 = sphi 0, %s232
      %s233 = sphi 0, %s230
      %s234 = sphi 0, %s233
      %s250 = sphi 0, %s234
      %s256 = sphi 0, %s258
      %s259 = sphi 0, %s256
      %s260 = sphi 0, %s259
      %s276 = sphi 0, %s260
      %s280 = sphi 0, %s280
      %s282 = sphi 0, %s280
      %s283 = sphi 0, %s282
      %s297 = sphi 0, %s283
    $region4: #{tpu_custom_call.1} parent=1 // loop_header_branch
      %30 = sbr.rel (%p28) target = $region8
    $region5: #{tpu_custom_call.1} parent=1 // loop_body
      %s32 = ssub.s32 %s27, 1
      %s33 = ssub.s32 %s27, 2
      %s34 = sadd.s32 %s27, 1
      %s36 = sadd.s32 %s35, 1
      %p39 = scmp.eq.s32.totalorder %s27, 1
      %p40 = scmp.ne.s32.totalorder %s35, %s37
      %p41 = scmp.eq.s32.totalorder %s27, 0
      %p42 = por %p40, %p41
      %p43 = scmp.ne.s32.totalorder %s35, %s37
      %p44 = scmp.eq.s32.totalorder %s32, 1
      %p45 = por %p43, %p44
      %p46 = scmp.ne.s32.totalorder %s37, %s38
      %p47 = scmp.eq.s32.totalorder %s32, 0
      %p48 = por %p46, %p47
      %p49 = scmp.ne.s32.totalorder %s37, %s38
      %p50 = scmp.eq.s32.totalorder %s33, 1
      %p51 = por %p49, %p50
      %p53 = scmp.ne.s32.totalorder %s38, %s52
      %p54 = scmp.eq.s32.totalorder %s33, 0
      %p55 = por %p53, %p54
      %s57 = sadd.s32 %s56, 1
      %p60 = scmp.eq.s32.totalorder %s27, 1
      %p61 = scmp.ne.s32.totalorder %s56, %s58
      %p62 = scmp.eq.s32.totalorder %s27, 0
      %p63 = por %p61, %p62
      %p64 = scmp.ne.s32.totalorder %s56, %s58
      %p65 = scmp.eq.s32.totalorder %s32, 1
      %p66 = por %p64, %p65
      %p67 = scmp.ne.s32.totalorder %s58, %s59
      %p68 = scmp.eq.s32.totalorder %s32, 0
      %p69 = por %p67, %p68
      %p70 = scmp.ne.s32.totalorder %s58, %s59
      %p71 = scmp.eq.s32.totalorder %s33, 1
      %p72 = por %p70, %p71
      %p74 = scmp.ne.s32.totalorder %s59, %s73
      %p75 = scmp.eq.s32.totalorder %s33, 0
      %p76 = por %p74, %p75
      %s78 = sadd.s32 %s77, 1
      %p81 = scmp.eq.s32.totalorder %s27, 1
      %p82 = scmp.ne.s32.totalorder %s77, %s79
      %p83 = scmp.eq.s32.totalorder %s27, 0
      %p84 = por %p82, %p83
      %p85 = scmp.ne.s32.totalorder %s77, %s79
      %p86 = scmp.eq.s32.totalorder %s32, 1
      %p87 = por %p85, %p86
      %p88 = scmp.ne.s32.totalorder %s79, %s80
      %p89 = scmp.eq.s32.totalorder %s32, 0
      %p90 = por %p88, %p89
      %p91 = scmp.ne.s32.totalorder %s79, %s80
      %p92 = scmp.eq.s32.totalorder %s33, 1
      %p93 = por %p91, %p92
      %p95 = scmp.ne.s32.totalorder %s80, %s94
      %p96 = scmp.eq.s32.totalorder %s33, 0
      %p97 = por %p95, %p96
      %s98 = ssub.s32 %s27, %s34
      %p99 = scmp.eq.s32.totalorder %s98, 0
      %s101 = sadd.s32 %s100, 1
      %s102 = scalar_select %p99, %s100, %s101
      %p105 = pneg %p99
      %p106 = scmp.eq.s32.totalorder %s27, 1
      %p107 = por %p105, %p106
      %p108 = scmp.ne.s32.totalorder %s100, %s103
      %p109 = scmp.eq.s32.totalorder %s27, 0
      %p110 = por %p108, %p109
      %p111 = scmp.ne.s32.totalorder %s100, %s103
      %p112 = scmp.eq.s32.totalorder %s32, 1
      %p113 = por %p111, %p112
      %p114 = scmp.ne.s32.totalorder %s103, %s104
      %p115 = scmp.eq.s32.totalorder %s32, 0
      %p116 = por %p114, %p115
      %p117 = scmp.ne.s32.totalorder %s103, %s104
      %p118 = scmp.eq.s32.totalorder %s33, 1
      %p119 = por %p117, %p118
      %p121 = scmp.ne.s32.totalorder %s104, %s120
      %p122 = scmp.eq.s32.totalorder %s33, 0
      %p123 = por %p121, %p122
      %s124 = ssub.s32 %s27, %s34
      %p125 = scmp.eq.s32.totalorder %s124, 0
      %s127 = sadd.s32 %s126, 1
      %s128 = scalar_select %p125, %s126, %s127
      %p131 = pneg %p125
      %p132 = scmp.eq.s32.totalorder %s27, 1
      %p133 = por %p131, %p132
      %p134 = scmp.ne.s32.totalorder %s126, %s129
      %p135 = scmp.eq.s32.totalorder %s27, 0
      %p136 = por %p134, %p135
      %p137 = scmp.ne.s32.totalorder %s126, %s129
      %p138 = scmp.eq.s32.totalorder %s32, 1
      %p139 = por %p137, %p138
      %p140 = scmp.ne.s32.totalorder %s129, %s130
      %p141 = scmp.eq.s32.totalorder %s32, 0
      %p142 = por %p140, %p141
      %p143 = scmp.ne.s32.totalorder %s129, %s130
      %p144 = scmp.eq.s32.totalorder %s33, 1
      %p145 = por %p143, %p144
      %p147 = scmp.ne.s32.totalorder %s130, %s146
      %p148 = scmp.eq.s32.totalorder %s33, 0
      %p149 = por %p147, %p148
      %s150 = ssub.s32 %s27, %s34
      %p151 = scmp.eq.s32.totalorder %s150, 0
      %s153 = sadd.s32 %s152, 1
      %s154 = scalar_select %p151, %s152, %s153
      %p157 = pneg %p151
      %p158 = scmp.eq.s32.totalorder %s27, 1
      %p159 = por %p157, %p158
      %p160 = scmp.ne.s32.totalorder %s152, %s155
      %p161 = scmp.eq.s32.totalorder %s27, 0
      %p162 = por %p160, %p161
      %p163 = scmp.ne.s32.totalorder %s152, %s155
      %p164 = scmp.eq.s32.totalorder %s32, 1
      %p165 = por %p163, %p164
      %p166 = scmp.ne.s32.totalorder %s155, %s156
      %p167 = scmp.eq.s32.totalorder %s32, 0
      %p168 = por %p166, %p167
      %p169 = scmp.ne.s32.totalorder %s155, %s156
      %p170 = scmp.eq.s32.totalorder %s33, 1
      %p171 = por %p169, %p170
      %p173 = scmp.ne.s32.totalorder %s156, %s172
      %p174 = scmp.eq.s32.totalorder %s33, 0
      %p175 = por %p173, %p174
      %s176 = ssub.s32 %s27, %s34
      %p177 = scmp.eq.s32.totalorder %s176, 0
      %s179 = sadd.s32 %s178, 1
      %s180 = scalar_select %p177, %s178, %s179
      %p183 = pneg %p177
      %p184 = scmp.eq.s32.totalorder %s27, 1
      %p185 = por %p183, %p184
      %p186 = scmp.ne.s32.totalorder %s178, %s181
      %p187 = scmp.eq.s32.totalorder %s27, 0
      %p188 = por %p186, %p187
      %p189 = scmp.ne.s32.totalorder %s178, %s181
      %p190 = scmp.eq.s32.totalorder %s32, 1
      %p191 = por %p189, %p190
      %p192 = scmp.ne.s32.totalorder %s181, %s182
      %p193 = scmp.eq.s32.totalorder %s32, 0
      %p194 = por %p192, %p193
      %p195 = scmp.ne.s32.totalorder %s181, %s182
      %p196 = scmp.eq.s32.totalorder %s33, 1
      %p197 = por %p195, %p196
      %p199 = scmp.ne.s32.totalorder %s182, %s198
      %p200 = scmp.eq.s32.totalorder %s33, 0
      %p201 = por %p199, %p200
      %s202 = ssub.s32 %s27, %s34
      %p203 = scmp.eq.s32.totalorder %s202, 0
      %s205 = sadd.s32 %s204, 1
      %s206 = scalar_select %p203, %s204, %s205
      %p209 = pneg %p203
      %p210 = scmp.eq.s32.totalorder %s27, 1
      %p211 = por %p209, %p210
      %p212 = scmp.ne.s32.totalorder %s204, %s207
      %p213 = scmp.eq.s32.totalorder %s27, 0
      %p214 = por %p212, %p213
      %p215 = scmp.ne.s32.totalorder %s204, %s207
      %p216 = scmp.eq.s32.totalorder %s32, 1
      %p217 = por %p215, %p216
      %p218 = scmp.ne.s32.totalorder %s207, %s208
      %p219 = scmp.eq.s32.totalorder %s32, 0
      %p220 = por %p218, %p219
      %p221 = scmp.ne.s32.totalorder %s207, %s208
      %p222 = scmp.eq.s32.totalorder %s33, 1
      %p223 = por %p221, %p222
      %p225 = scmp.ne.s32.totalorder %s208, %s224
      %p226 = scmp.eq.s32.totalorder %s33, 0
      %p227 = por %p225, %p226
      %s228 = ssub.s32 %s27, %s34
      %p229 = scmp.eq.s32.totalorder %s228, 0
      %s231 = sadd.s32 %s230, 1
      %s232 = scalar_select %p229, %s230, %s231
      %p235 = pneg %p229
      %p236 = scmp.eq.s32.totalorder %s27, 1
      %p237 = por %p235, %p236
      %p238 = scmp.ne.s32.totalorder %s230, %s233
      %p239 = scmp.eq.s32.totalorder %s27, 0
      %p240 = por %p238, %p239
      %p241 = scmp.ne.s32.totalorder %s230, %s233
      %p242 = scmp.eq.s32.totalorder %s32, 1
      %p243 = por %p241, %p242
      %p244 = scmp.ne.s32.totalorder %s233, %s234
      %p245 = scmp.eq.s32.totalorder %s32, 0
      %p246 = por %p244, %p245
      %p247 = scmp.ne.s32.totalorder %s233, %s234
      %p248 = scmp.eq.s32.totalorder %s33, 1
      %p249 = por %p247, %p248
      %p251 = scmp.ne.s32.totalorder %s234, %s250
      %p252 = scmp.eq.s32.totalorder %s33, 0
      %p253 = por %p251, %p252
      %s254 = ssub.s32 %s27, %s34
      %p255 = scmp.eq.s32.totalorder %s254, 0
      %s257 = sadd.s32 %s256, 1
      %s258 = scalar_select %p255, %s256, %s257
      %p261 = pneg %p255
      %p262 = scmp.eq.s32.totalorder %s27, 1
      %p263 = por %p261, %p262
      %p264 = scmp.ne.s32.totalorder %s256, %s259
      %p265 = scmp.eq.s32.totalorder %s27, 0
      %p266 = por %p264, %p265
      %p267 = scmp.ne.s32.totalorder %s256, %s259
      %p268 = scmp.eq.s32.totalorder %s32, 1
      %p269 = por %p267, %p268
      %p270 = scmp.ne.s32.totalorder %s259, %s260
      %p271 = scmp.eq.s32.totalorder %s32, 0
      %p272 = por %p270, %p271
      %p273 = scmp.ne.s32.totalorder %s259, %s260
      %p274 = scmp.eq.s32.totalorder %s33, 1
      %p275 = por %p273, %p274
      %p277 = scmp.ne.s32.totalorder %s260, %s276
      %p278 = scmp.eq.s32.totalorder %s33, 0
      %p279 = por %p277, %p278
      %s281 = sadd.s32 %s280, 1
      %p284 = scmp.eq.s32.totalorder %s27, 1
      %p285 = scmp.ne.s32.totalorder %s280, %s282
      %p286 = scmp.eq.s32.totalorder %s27, 0
      %p287 = por %p285, %p286
      %p288 = scmp.ne.s32.totalorder %s280, %s282
      %p289 = scmp.eq.s32.totalorder %s32, 1
      %p290 = por %p288, %p289
      %p291 = scmp.ne.s32.totalorder %s282, %s283
      %p292 = scmp.eq.s32.totalorder %s32, 0
      %p293 = por %p291, %p292
      %p294 = scmp.ne.s32.totalorder %s282, %s283
      %p295 = scmp.eq.s32.totalorder %s33, 1
      %p296 = por %p294, %p295
      %p298 = scmp.ne.s32.totalorder %s283, %s297
      %p299 = scmp.eq.s32.totalorder %s33, 0
      %p300 = por %p298, %p299
      %p301 = scmp.le.s32.totalorder 1, %s27
      %p302 = scmp.lt.s32.totalorder %s27, 3
      %p303 = pnand %p301, %p302
      %p304 = pneg %p303
      // Predicated region
      $region9: #{tpu_custom_call.1} parent=5 // pred_check
        _
      $region10: #{tpu_custom_call.1} parent=5 // pred_check_branch
        %306 = sbr.rel (%p303) target = $region12
      $region11: #{tpu_custom_call.1} parent=5 // pred_region
        %s307 = ssub.s32 %s27, 1
        // Predicated region
        $region13: #{tpu_custom_call.1} parent=11 // pred_check
          %p308 = pneg %p48
        $region14: #{tpu_custom_call.1} parent=11 // pred_check_branch
          %310 = sbr.rel (%p308) target = $region16
        $region15: #{tpu_custom_call.1} parent=11 // pred_region
          _
        $region16: #{tpu_custom_call.1} parent=11 // pred_fallthru
          _
        // Predicated region
        $region17: #{tpu_custom_call.1} parent=11 // pred_check
          %p311 = pneg %p69
        $region18: #{tpu_custom_call.1} parent=11 // pred_check_branch
          %313 = sbr.rel (%p311) target = $region20
        $region19: #{tpu_custom_call.1} parent=11 // pred_region
          _
        $region20: #{tpu_custom_call.1} parent=11 // pred_fallthru
          _
        // Predicated region
        $region21: #{tpu_custom_call.1} parent=11 // pred_check
          %p314 = pneg %p90
        $region22: #{tpu_custom_call.1} parent=11 // pred_check_branch
          %316 = sbr.rel (%p314) target = $region24
        $region23: #{tpu_custom_call.1} parent=11 // pred_region
          %318 = vsyncadd [#allocation3], 0
          %s320 = sshll.u32 %s2, 4
          %s321 = int_to_ptr.hbm [resolvable:$true] %s320
          %s322 = sshll.u32 [#allocation2], 4
          %s323 = int_to_ptr.vmem [resolvable:$true] %s322
          %325 = dma.hbm_to_vmem [thread:$0]  %s321, 32, %s323, [#allocation3]
        $region24: #{tpu_custom_call.1} parent=11 // pred_fallthru
          _
      $region12: #{tpu_custom_call.1} parent=5 // pred_fallthru
        _
      %p326 = scmp.lt.s32.totalorder %s27, 2
      // Predicated region
      $region25: #{tpu_custom_call.1} parent=5 // pred_check
        %p327 = pneg %p326
      $region26: #{tpu_custom_call.1} parent=5 // pred_check_branch
        %329 = sbr.rel (%p327) target = $region28
      $region27: #{tpu_custom_call.1} parent=5 // pred_region
        // Predicated region
        $region29: #{tpu_custom_call.1} parent=27 // pred_check
          %p330 = pneg %p110
        $region30: #{tpu_custom_call.1} parent=27 // pred_check_branch
          %332 = sbr.rel (%p330) target = $region32
        $region31: #{tpu_custom_call.1} parent=27 // pred_region
          %s333 = sand.u32 %s27, 1
          %s334 = scalar_lea.sflag [#allocation6], %s333
          %s335 = sand.u32 %s100, 1
          %s336 = smul.addr %s335, 192
          %s337 = scalar_lea.vmem [#allocation5], %s336
          %339 = vsyncadd %s334, 0
          %s340 = smul.addr %s27, 48
          %s341 = smul.addr %s340, 4
          %s342 = scalar_lea.hbm %s3, %s341
          %s343 = sshll.u32 %s342, 4
          %s344 = int_to_ptr.hbm [resolvable:$true] %s343
          %s345 = sshll.u32 %s337, 4
          %s346 = int_to_ptr.vmem [resolvable:$true] %s345
          %351 = dma.hbm_to_vmem [thread:$0]  %s344, 3072, %s346, %s334, 192, 192, 12
        $region32: #{tpu_custom_call.1} parent=27 // pred_fallthru
          _
        // Predicated region
        $region33: #{tpu_custom_call.1} parent=27 // pred_check
          %p352 = pneg %p136
        $region34: #{tpu_custom_call.1} parent=27 // pred_check_branch
          %354 = sbr.rel (%p352) target = $region36
        $region35: #{tpu_custom_call.1} parent=27 // pred_region
          %s355 = sand.u32 %s27, 1
          %s356 = scalar_lea.sflag [#allocation6], %s355
          %s357 = sand.u32 %s126, 1
          %s358 = smul.addr %s357, 64
          %s359 = scalar_lea.vmem [#allocation7], %s358
          %361 = vsyncadd %s356, 0
          %s362 = smul.addr %s27, 16
          %s363 = smul.addr %s362, 4
          %s364 = scalar_lea.hbm %s4, %s363
          %s365 = sshll.u32 %s364, 4
          %s366 = int_to_ptr.hbm [resolvable:$true] %s365
          %s367 = sshll.u32 %s359, 4
          %s368 = int_to_ptr.vmem [resolvable:$true] %s367
          %373 = dma.hbm_to_vmem [thread:$0]  %s366, 1024, %s368, %s356, 64, 64, 4
        $region36: #{tpu_custom_call.1} parent=27 // pred_fallthru
          _
        // Predicated region
        $region37: #{tpu_custom_call.1} parent=27 // pred_check
          %p374 = pneg %p162
        $region38: #{tpu_custom_call.1} parent=27 // pred_check_branch
          %376 = sbr.rel (%p374) target = $region40
        $region39: #{tpu_custom_call.1} parent=27 // pred_region
          %s377 = sand.u32 %s27, 1
          %s378 = scalar_lea.sflag [#allocation9], %s377
          %s379 = sand.u32 %s152, 1
          %s380 = smul.addr %s379, 256
          %s381 = scalar_lea.vmem [#allocation8], %s380
          %383 = vsyncadd %s378, 0
          %s384 = smul.addr %s27, 64
          %s385 = smul.addr %s384, 4
          %s386 = scalar_lea.hbm %s5, %s385
          %s387 = sshll.u32 %s386, 4
          %s388 = int_to_ptr.hbm [resolvable:$true] %s387
          %s389 = sshll.u32 %s381, 4
          %s390 = int_to_ptr.vmem [resolvable:$true] %s389
          %395 = dma.hbm_to_vmem [thread:$0]  %s388, 4096, %s390, %s378, 256, 256, 16
        $region40: #{tpu_custom_call.1} parent=27 // pred_fallthru
          _
        // Predicated region
        $region41: #{tpu_custom_call.1} parent=27 // pred_check
          %p396 = pneg %p188
        $region42: #{tpu_custom_call.1} parent=27 // pred_check_branch
          %398 = sbr.rel (%p396) target = $region44
        $region43: #{tpu_custom_call.1} parent=27 // pred_region
          %s399 = sand.u32 %s27, 1
          %s400 = scalar_lea.sflag [#allocation9], %s399
          %s401 = sand.u32 %s178, 1
          %s402 = smul.addr %s401, 256
          %s403 = scalar_lea.vmem [#allocation10], %s402
          %405 = vsyncadd %s400, 0
          %s406 = smul.addr %s27, 64
          %s407 = smul.addr %s406, 4
          %s408 = scalar_lea.hbm %s6, %s407
          %s409 = sshll.u32 %s408, 4
          %s410 = int_to_ptr.hbm [resolvable:$true] %s409
          %s411 = sshll.u32 %s403, 4
          %s412 = int_to_ptr.vmem [resolvable:$true] %s411
          %417 = dma.hbm_to_vmem [thread:$0]  %s410, 4096, %s412, %s400, 64, 64, 4
        $region44: #{tpu_custom_call.1} parent=27 // pred_fallthru
          _
        // Predicated region
        $region45: #{tpu_custom_call.1} parent=27 // pred_check
          %p418 = pneg %p214
        $region46: #{tpu_custom_call.1} parent=27 // pred_check_branch
          %420 = sbr.rel (%p418) target = $region48
        $region47: #{tpu_custom_call.1} parent=27 // pred_region
          %s421 = sand.u32 %s204, 1
          %s422 = scalar_lea.sflag [#allocation12], %s421
          %s423 = sand.u32 %s204, 1
          %s424 = smul.addr %s423, 3
          %s425 = scalar_lea.vmem [#allocation11], %s424
          %427 = vsyncadd %s422, 0
          %s428 = smul.addr %s27, 3
          %s429 = scalar_lea.hbm %s7, %s428
          %s431 = sshll.u32 %s429, 4
          %s432 = int_to_ptr.hbm [resolvable:$true] %s431
          %s433 = sshll.u32 %s425, 4
          %s434 = int_to_ptr.vmem [resolvable:$true] %s433
          %436 = dma.hbm_to_vmem [thread:$0]  %s432, 48, %s434, %s422
        $region48: #{tpu_custom_call.1} parent=27 // pred_fallthru
          _
        // Predicated region
        $region49: #{tpu_custom_call.1} parent=27 // pred_check
          %p437 = pneg %p240
        $region50: #{tpu_custom_call.1} parent=27 // pred_check_branch
          %439 = sbr.rel (%p437) target = $region52
        $region51: #{tpu_custom_call.1} parent=27 // pred_region
          %p440 = scmp.lt.s32.totalorder %s27, 1
          %s441 = scalar_select %p440, %s27, 1
          %s442 = smul.addr %s441, 4
          %s443 = scalar_lea.vmem %s8, %s442
        $region52: #{tpu_custom_call.1} parent=27 // pred_fallthru
          _
        // Predicated region
        $region53: #{tpu_custom_call.1} parent=27 // pred_check
          %p444 = pneg %p266
        $region54: #{tpu_custom_call.1} parent=27 // pred_check_branch
          %446 = sbr.rel (%p444) target = $region56
        $region55: #{tpu_custom_call.1} parent=27 // pred_region
          %p447 = scmp.lt.s32.totalorder %s27, 1
          %s448 = scalar_select %p447, %s27, 1
          %s449 = smul.addr %s448, 8
          %s450 = scalar_lea.vmem %s9, %s449
        $region56: #{tpu_custom_call.1} parent=27 // pred_fallthru
          _
      $region28: #{tpu_custom_call.1} parent=5 // pred_fallthru
        _
      %p451 = scmp.le.s32.totalorder 1, %s27
      %p452 = scmp.lt.s32.totalorder %s27, 3
      %p453 = pnand %p451, %p452
      %p454 = pneg %p453
      // Predicated region
      $region57: #{tpu_custom_call.1} parent=5 // pred_check
        _
      $region58: #{tpu_custom_call.1} parent=5 // pred_check_branch
        %456 = sbr.rel (%p453) target = $region60
      $region59: #{tpu_custom_call.1} parent=5 // pred_region
        %s457 = ssub.s32 %s27, 1
        // Predicated region
        $region61: #{tpu_custom_call.1} parent=59 // pred_check
          %p458 = pneg %p90
        $region62: #{tpu_custom_call.1} parent=59 // pred_check_branch
          %460 = sbr.rel (%p458) target = $region64
        $region63: #{tpu_custom_call.1} parent=59 // pred_region
          %462 = dma.done [#allocation3], 32
        $region64: #{tpu_custom_call.1} parent=59 // pred_fallthru
          _
        %s463 = sand.u32 %s32, 1
        %s464 = scalar_lea.sflag [#allocation6], %s463
        %s465 = sand.u32 %s103, 1
        %s466 = smul.addr %s465, 192
        %s467 = scalar_lea.vmem [#allocation5], %s466
        // Predicated region
        $region65: #{tpu_custom_call.1} parent=59 // pred_check
          %p468 = pneg %p116
        $region66: #{tpu_custom_call.1} parent=59 // pred_check_branch
          %470 = sbr.rel (%p468) target = $region68
        $region67: #{tpu_custom_call.1} parent=59 // pred_region
          %472 = dma.done %s464, 3072
        $region68: #{tpu_custom_call.1} parent=59 // pred_fallthru
          _
        %s473 = sand.u32 %s32, 1
        %s474 = scalar_lea.sflag [#allocation6], %s473
        %s475 = sand.u32 %s129, 1
        %s476 = smul.addr %s475, 64
        %s477 = scalar_lea.vmem [#allocation7], %s476
        // Predicated region
        $region69: #{tpu_custom_call.1} parent=59 // pred_check
          %p478 = pneg %p142
        $region70: #{tpu_custom_call.1} parent=59 // pred_check_branch
          %480 = sbr.rel (%p478) target = $region72
        $region71: #{tpu_custom_call.1} parent=59 // pred_region
          %482 = dma.done %s474, 1024
        $region72: #{tpu_custom_call.1} parent=59 // pred_fallthru
          _
        %s483 = sand.u32 %s32, 1
        %s484 = scalar_lea.sflag [#allocation9], %s483
        %s485 = sand.u32 %s155, 1
        %s486 = smul.addr %s485, 256
        %s487 = scalar_lea.vmem [#allocation8], %s486
        // Predicated region
        $region73: #{tpu_custom_call.1} parent=59 // pred_check
          %p488 = pneg %p168
        $region74: #{tpu_custom_call.1} parent=59 // pred_check_branch
          %490 = sbr.rel (%p488) target = $region76
        $region75: #{tpu_custom_call.1} parent=59 // pred_region
          %492 = dma.done %s484, 4096
        $region76: #{tpu_custom_call.1} parent=59 // pred_fallthru
          _
        %s493 = sand.u32 %s32, 1
        %s494 = scalar_lea.sflag [#allocation9], %s493
        %s495 = sand.u32 %s181, 1
        %s496 = smul.addr %s495, 256
        %s497 = scalar_lea.vmem [#allocation10], %s496
        // Predicated region
        $region77: #{tpu_custom_call.1} parent=59 // pred_check
          %p498 = pneg %p194
        $region78: #{tpu_custom_call.1} parent=59 // pred_check_branch
          %500 = sbr.rel (%p498) target = $region80
        $region79: #{tpu_custom_call.1} parent=59 // pred_region
          %502 = dma.done %s494, 4096
        $region80: #{tpu_custom_call.1} parent=59 // pred_fallthru
          _
        %s503 = sand.u32 %s207, 1
        %s504 = scalar_lea.sflag [#allocation12], %s503
        %s505 = sand.u32 %s207, 1
        %s506 = smul.addr %s505, 3
        %s507 = scalar_lea.vmem [#allocation11], %s506
        // Predicated region
        $region81: #{tpu_custom_call.1} parent=59 // pred_check
          %p508 = pneg %p220
        $region82: #{tpu_custom_call.1} parent=59 // pred_check_branch
          %510 = sbr.rel (%p508) target = $region84
        $region83: #{tpu_custom_call.1} parent=59 // pred_region
          %512 = dma.done %s504, 48
        $region84: #{tpu_custom_call.1} parent=59 // pred_fallthru
          _
        %p513 = pneg %p48
        %p514 = pneg %p45
        %p515 = pneg %p69
        %p516 = pneg %p66
        %p517 = pneg %p90
        %p518 = pneg %p87
        %s519 = sand.u32 %s32, 1
        %s520 = scalar_lea.sflag [#allocation6], %s519
        %s521 = sand.u32 %s103, 1
        %s522 = smul.addr %s521, 192
        %s523 = scalar_lea.vmem [#allocation5], %s522
        %p524 = pneg %p116
        %p525 = pneg %p113
        %s526 = sand.u32 %s32, 1
        %s527 = scalar_lea.sflag [#allocation6], %s526
        %s528 = sand.u32 %s129, 1
        %s529 = smul.addr %s528, 64
        %s530 = scalar_lea.vmem [#allocation7], %s529
        %p531 = pneg %p142
        %p532 = pneg %p139
        %s533 = sand.u32 %s32, 1
        %s534 = scalar_lea.sflag [#allocation9], %s533
        %s535 = sand.u32 %s155, 1
        %s536 = smul.addr %s535, 256
        %s537 = scalar_lea.vmem [#allocation8], %s536
        %p538 = pneg %p168
        %p539 = pneg %p165
        %s540 = sand.u32 %s32, 1
        %s541 = scalar_lea.sflag [#allocation9], %s540
        %s542 = sand.u32 %s181, 1
        %s543 = smul.addr %s542, 256
        %s544 = scalar_lea.vmem [#allocation10], %s543
        %p545 = pneg %p194
        %p546 = pneg %p191
        %s547 = sand.u32 %s207, 1
        %s548 = scalar_lea.sflag [#allocation12], %s547
        %s549 = sand.u32 %s207, 1
        %s550 = smul.addr %s549, 3
        %s551 = scalar_lea.vmem [#allocation11], %s550
        %p552 = pneg %p220
        %p553 = pneg %p217
        %p554 = scmp.lt.s32.totalorder %s32, 1
        %s555 = scalar_select %p554, %s32, 1
        %s556 = smul.addr %s555, 4
        %s557 = scalar_lea.vmem %s8, %s556
        %p558 = pneg %p246
        %p559 = pneg %p243
        %p560 = scmp.lt.s32.totalorder %s32, 1
        %s561 = scalar_select %p560, %s32, 1
        %s562 = smul.addr %s561, 8
        %s563 = scalar_lea.vmem %s9, %s562
        %p564 = pneg %p272
        %p565 = pneg %p269
        %p566 = pneg %p293
        %p567 = pneg %p290
        %p568 = scmp.lt.s32.totalorder %s32, 1
        %s569 = scalar_select %p568, %s32, 1
        %s570 = smul.addr %s569, 4
        %s571 = scalar_lea.vmem %s8, %s570
        %p572 = scmp.lt.s32.totalorder %s32, 1
        %s573 = scalar_select %p572, %s32, 1
        %s574 = smul.addr %s573, 8
        %s575 = scalar_lea.vmem %s9, %s574
        %p577 = scmp.eq.s32.totalorder %s32, 0
        // Predicated region
        $region85: #{tpu_custom_call.1} parent=59 // pred_check
          %p578 = pneg %p577
        $region86: #{tpu_custom_call.1} parent=59 // pred_check_branch
          %580 = sbr.rel (%p578) target = $region88
        $region87: #{tpu_custom_call.1} parent=59 // pred_region
          %v581 = vld [vmem:[#allocation2] sm:$0x3]
          %v582 = vld [vmem:[%s0] sm:$0xff]
          %v583 = vld [vmem:[%s0 + $0x8] sm:$0xff]
          %584 = vadd.xlane.f32.xlu0 %v582
          %v585 = vpop.xlane.xlu0 %584
          %586 = vadd.xlane.f32.xlu0 %v583
          %v587 = vpop.xlane.xlu0 %586
          %v588 = vrcp.pop 128.0
          %v589 = vmul.f32 128.0, %v588
          %v590 = vsub.f32 1.0, %v589
          %v591 = vmul.f32 %v588, %v590
          %v592 = vadd.f32 %v588, %v591
          %vm593 = vweird.f32 %v588
          %v594 = vsel %vm593, %v588, %v592
          %v595 = vmul.f32 %v585, %v594
          %v596 = vmul.f32 %v587, %v594
          %v597 = vsub.f32 %v582, %v595
          %v598 = vsub.f32 %v583, %v596
          %v599 = vmul.f32 %v597, %v597
          %v600 = vmul.f32 %v598, %v598
          %601 = vadd.xlane.f32.xlu0 %v599
          %v602 = vpop.xlane.xlu0 %601
          %603 = vadd.xlane.f32.xlu0 %v600
          %v604 = vpop.xlane.xlu0 %603
          %v605 = vmul.f32 %v602, %v594
          %v606 = vmul.f32 %v604, %v594
          %v607 = vadd.f32 %v605, 1e-12
          %v608 = vadd.f32 %v606, 1e-12
          %v609 = vrsqrt.pop %v607
          %v610 = vmul.f32 %v609, %v607
          %v611 = vmul.f32 %v610, %v609
          %v612 = vmul.f32 0.5, %v611
          %v613 = vsub.f32 1.5, %v612
          %v614 = vmul.f32 %v609, %v613
          %vm615 = vweird.f32 %v607
          %vm616 = vweird.f32 %v609
          %vm617 = vmor %vm615, %vm616
          %v618 = vsel %vm617, %v609, %v614
          %v619 = vrsqrt.pop %v608
          %v620 = vmul.f32 %v619, %v608
          %v621 = vmul.f32 %v620, %v619
          %v622 = vmul.f32 0.5, %v621
          %v623 = vsub.f32 1.5, %v622
          %v624 = vmul.f32 %v619, %v623
          %vm625 = vweird.f32 %v608
          %vm626 = vweird.f32 %v619
          %vm627 = vmor %vm625, %vm626
          %v628 = vsel %vm627, %v619, %v624
          %v629 = vmul.f32 %v597, %v618
          %v630 = vmul.f32 %v598, %v628
          %v631 = vperm.slane %v581, 0
          %v632 = vmul.f32 %v629, %v631
          %v633 = vmul.f32 %v630, %v631
          %v634 = vperm.slane %v581, 1
          %v635 = vadd.f32 %v632, %v634
          %v636 = vadd.f32 %v633, %v634
          %637 = vst [vmem:[#allocation13] sm:$0xff] %v635
          %638 = vst [vmem:[#allocation13 + $0x8] sm:$0xff] %v636
        $region88: #{tpu_custom_call.1} parent=59 // pred_fallthru
          _
        %v639 = vld [vmem:[#allocation13] sm:$0xff]
        %v640 = vld [vmem:[#allocation13 + $0x8] sm:$0xff]
        %v641 = vpack.c.bf16 %v640, %v639
        %v642 = vld [vmem:[%s575] sm:$0x3f]
        %v643 = vld [vmem:[%s467] sm:$0xff]
        %v644 = vld [vmem:[%s467 + $0x8] sm:$0xf]
        %v645 = vld [vmem:[%s467 + $0xc] sm:$0xff]
        %v646 = vld [vmem:[%s467 + $0x14] sm:$0xf]
        %v647 = vld [vmem:[%s467 + $0x18] sm:$0xff]
        %v648 = vld [vmem:[%s467 + $0x20] sm:$0xf]
        %v649 = vld [vmem:[%s467 + $0x24] sm:$0xff]
        %v650 = vld [vmem:[%s467 + $0x2c] sm:$0xf]
        %v651 = vld [vmem:[%s467 + $0x30] sm:$0xff]
        %v652 = vld [vmem:[%s467 + $0x38] sm:$0xf]
        %v653 = vld [vmem:[%s467 + $0x3c] sm:$0xff]
        %v654 = vld [vmem:[%s467 + $0x44] sm:$0xf]
        %v655 = vld [vmem:[%s467 + $0x48] sm:$0xff]
        %v656 = vld [vmem:[%s467 + $0x50] sm:$0xf]
        %v657 = vld [vmem:[%s467 + $0x54] sm:$0xff]
        %v658 = vld [vmem:[%s467 + $0x5c] sm:$0xf]
        %v659 = vld [vmem:[%s467 + $0x60] sm:$0xff]
        %v660 = vld [vmem:[%s467 + $0x68] sm:$0xf]
        %v661 = vld [vmem:[%s467 + $0x6c] sm:$0xff]
        %v662 = vld [vmem:[%s467 + $0x74] sm:$0xf]
        %v663 = vld [vmem:[%s467 + $0x78] sm:$0xff]
        %v664 = vld [vmem:[%s467 + $0x80] sm:$0xf]
        %v665 = vld [vmem:[%s467 + $0x84] sm:$0xff]
        %v666 = vld [vmem:[%s467 + $0x8c] sm:$0xf]
        %v667 = vld [vmem:[%s467 + $0x90] sm:$0xff]
        %v668 = vld [vmem:[%s467 + $0x98] sm:$0xf]
        %v669 = vld [vmem:[%s467 + $0x9c] sm:$0xff]
        %v670 = vld [vmem:[%s467 + $0xa4] sm:$0xf]
        %v671 = vld [vmem:[%s467 + $0xa8] sm:$0xff]
        %v672 = vld [vmem:[%s467 + $0xb0] sm:$0xf]
        %v673 = vld [vmem:[%s467 + $0xb4] sm:$0xff]
        %v674 = vld [vmem:[%s467 + $0xbc] sm:$0xf]
        %v675 = vld [vmem:[%s507] sm:$0x7]
        %v677 = vperm.slane %v675, 0
        %v678 = vperm.slane %v675, 1
        %v679 = vperm.slane %v675, 2
        %v715 = vunpack.c.l.b16 %v643
        %v716 = vunpack.c.h.b16 %v643
        %v717 = vunpack.c.l.b16 %v644
        %v718 = vunpack.c.l.b16 %v645
        %v719 = vunpack.c.h.b16 %v645
        %v720 = vunpack.c.l.b16 %v646
        %v721 = vunpack.c.l.b16 %v647
        %v722 = vunpack.c.h.b16 %v647
        %v723 = vunpack.c.l.b16 %v648
        %v724 = vunpack.c.l.b16 %v649
        %v725 = vunpack.c.h.b16 %v649
        %v726 = vunpack.c.l.b16 %v650
        %v727 = vunpack.c.l.b16 %v651
        %v728 = vunpack.c.h.b16 %v651
        %v729 = vunpack.c.l.b16 %v652
        %v730 = vunpack.c.l.b16 %v653
        %v731 = vunpack.c.h.b16 %v653
        %v732 = vunpack.c.l.b16 %v654
        %v733 = vunpack.c.l.b16 %v655
        %v734 = vunpack.c.h.b16 %v655
        %v735 = vunpack.c.l.b16 %v656
        %v736 = vunpack.c.l.b16 %v657
        %v737 = vunpack.c.h.b16 %v657
        %v738 = vunpack.c.l.b16 %v658
        %v739 = vunpack.c.l.b16 %v659
        %v740 = vunpack.c.h.b16 %v659
        %v741 = vunpack.c.l.b16 %v660
        %v742 = vunpack.c.l.b16 %v661
        %v743 = vunpack.c.h.b16 %v661
        %v744 = vunpack.c.l.b16 %v662
        %v745 = vunpack.c.l.b16 %v663
        %v746 = vunpack.c.h.b16 %v663
        %v747 = vunpack.c.l.b16 %v664
        %v748 = vunpack.c.l.b16 %v665
        %v749 = vunpack.c.h.b16 %v665
        %v750 = vunpack.c.l.b16 %v666
        %v751 = vunpack.c.l.b16 %v667
        %v752 = vunpack.c.h.b16 %v667
        %v753 = vunpack.c.l.b16 %v668
        %v754 = vunpack.c.l.b16 %v669
        %v755 = vunpack.c.h.b16 %v669
        %v756 = vunpack.c.l.b16 %v670
        %v757 = vunpack.c.l.b16 %v671
        %v758 = vunpack.c.h.b16 %v671
        %v759 = vunpack.c.l.b16 %v672
        %v760 = vunpack.c.l.b16 %v673
        %v761 = vunpack.c.h.b16 %v673
        %v762 = vunpack.c.l.b16 %v674
        %v763 = vpack.c.b16 %v718, %v715
        %v764 = vpack.c.b16 %v719, %v716
        %v765 = vpack.c.b16 %v720, %v717
        %v766 = vpack.c.b16 %v724, %v721
        %v767 = vpack.c.b16 %v725, %v722
        %v768 = vpack.c.b16 %v726, %v723
        %v769 = vpack.c.b16 %v730, %v727
        %v770 = vpack.c.b16 %v731, %v728
        %v771 = vpack.c.b16 %v732, %v729
        %v772 = vpack.c.b16 %v736, %v733
        %v773 = vpack.c.b16 %v737, %v734
        %v774 = vpack.c.b16 %v738, %v735
        %v775 = vpack.c.b16 %v742, %v739
        %v776 = vpack.c.b16 %v743, %v740
        %v777 = vpack.c.b16 %v744, %v741
        %v778 = vpack.c.b16 %v748, %v745
        %v779 = vpack.c.b16 %v749, %v746
        %v780 = vpack.c.b16 %v750, %v747
        %v781 = vpack.c.b16 %v754, %v751
        %v782 = vpack.c.b16 %v755, %v752
        %v783 = vpack.c.b16 %v756, %v753
        %v784 = vpack.c.b16 %v760, %v757
        %v785 = vpack.c.b16 %v761, %v758
        %v786 = vpack.c.b16 %v762, %v759
        %811 = vmatpush.bf16.msra.mxu0 %v784
        %812 = vmatpush.bf16.msra.mxu0 %v781
        %813 = vmatpush.bf16.msra.mxu0 %v778
        %814 = vmatpush.bf16.msra.mxu0 %v775
        %815 = vmatpush.bf16.msra.mxu0 %v772
        %816 = vmatpush.bf16.msra.mxu0 %v769
        %817 = vmatpush.bf16.msra.mxu0 %v766
        %818 = vmatpush.bf16.msra.mxu0 %v763
        %819 = vmatmul.bf16.gmra.mxu0 %v641
        %v820 = vpop.f32.mrf.mxu0
        %v821 = vadd.f32 %v677, %v820
        %v822 = vpop.f32.mrf.mxu0
        %v823 = vadd.f32 %v677, %v822
        %824 = vdwg.mxu0
        %825 = vmatpush.bf16.msra.mxu0 %v785
        %826 = vmatpush.bf16.msra.mxu0 %v782
        %827 = vmatpush.bf16.msra.mxu0 %v779
        %828 = vmatpush.bf16.msra.mxu0 %v776
        %829 = vmatpush.bf16.msra.mxu0 %v773
        %830 = vmatpush.bf16.msra.mxu0 %v770
        %831 = vmatpush.bf16.msra.mxu0 %v767
        %832 = vmatpush.bf16.msra.mxu0 %v764
        %833 = vmatmul.bf16.gmra.mxu0 %v641
        %v834 = vpop.f32.mrf.mxu0
        %v835 = vadd.f32 %v678, %v834
        %v836 = vpop.f32.mrf.mxu0
        %v837 = vadd.f32 %v678, %v836
        %838 = vdwg.mxu0
        %839 = vmatpush.bf16.msra.mxu0 %v786
        %840 = vmatpush.bf16.msra.mxu0 %v783
        %841 = vmatpush.bf16.msra.mxu0 %v780
        %842 = vmatpush.bf16.msra.mxu0 %v777
        %843 = vmatpush.bf16.msra.mxu0 %v774
        %844 = vmatpush.bf16.msra.mxu0 %v771
        %845 = vmatpush.bf16.msra.mxu0 %v768
        %846 = vmatpush.bf16.msra.mxu0 %v765
        %847 = vmatmul.bf16.gmra.mxu0 %v641
        %v848 = vpop.f32.mrf.mxu0
        %v849 = vadd.f32 %v679, %v848
        %v850 = vpop.f32.mrf.mxu0
        %v851 = vadd.f32 %v679, %v850
        %852 = vdwg.mxu0
        %855 = vrot.lane.b32.xlu0 %v821, 96
        %v856 = vpop.permute.xlu0 %855
        %857 = vrot.lane.b32.xlu0 %v823, 96
        %v858 = vpop.permute.xlu0 %857
        %861 = vrot.lane.b32.xlu0 %v821, 64
        %v862 = vpop.permute.xlu0 %861
        %863 = vrot.lane.b32.xlu0 %v823, 64
        %v864 = vpop.permute.xlu0 %863
        %867 = vrot.lane.b32.xlu0 %v821, 32
        %v868 = vpop.permute.xlu0 %867
        %869 = vrot.lane.b32.xlu0 %v823, 32
        %v870 = vpop.permute.xlu0 %869
        %v873 = vpack.c.bf16 %v821, %v821
        %v874 = vpack.c.bf16 %v823, %v823
        %v875 = vpack.c.bf16 %v856, %v856
        %v876 = vpack.c.bf16 %v858, %v858
        %v877 = vpack.c.bf16 %v862, %v862
        %v878 = vpack.c.bf16 %v864, %v864
        %v879 = vpack.c.bf16 %v868, %v868
        %v880 = vpack.c.bf16 %v870, %v870
        %883 = vrot.lane.b32.xlu0 %v835, 96
        %v884 = vpop.permute.xlu0 %883
        %885 = vrot.lane.b32.xlu0 %v837, 96
        %v886 = vpop.permute.xlu0 %885
        %889 = vrot.lane.b32.xlu0 %v835, 64
        %v890 = vpop.permute.xlu0 %889
        %891 = vrot.lane.b32.xlu0 %v837, 64
        %v892 = vpop.permute.xlu0 %891
        %895 = vrot.lane.b32.xlu0 %v835, 32
        %v896 = vpop.permute.xlu0 %895
        %897 = vrot.lane.b32.xlu0 %v837, 32
        %v898 = vpop.permute.xlu0 %897
        %v901 = vpack.c.bf16 %v835, %v835
        %v902 = vpack.c.bf16 %v837, %v837
        %v903 = vpack.c.bf16 %v884, %v884
        %v904 = vpack.c.bf16 %v886, %v886
        %v905 = vpack.c.bf16 %v890, %v890
        %v906 = vpack.c.bf16 %v892, %v892
        %v907 = vpack.c.bf16 %v896, %v896
        %v908 = vpack.c.bf16 %v898, %v898
        %911 = vrot.lane.b32.xlu0 %v849, 96
        %v912 = vpop.permute.xlu0 %911
        %913 = vrot.lane.b32.xlu0 %v851, 96
        %v914 = vpop.permute.xlu0 %913
        %917 = vrot.lane.b32.xlu0 %v849, 64
        %v918 = vpop.permute.xlu0 %917
        %919 = vrot.lane.b32.xlu0 %v851, 64
        %v920 = vpop.permute.xlu0 %919
        %923 = vrot.lane.b32.xlu0 %v849, 32
        %v924 = vpop.permute.xlu0 %923
        %925 = vrot.lane.b32.xlu0 %v851, 32
        %v926 = vpop.permute.xlu0 %925
        %v929 = vpack.c.bf16 %v849, %v849
        %v930 = vpack.c.bf16 %v851, %v851
        %v931 = vpack.c.bf16 %v912, %v912
        %v932 = vpack.c.bf16 %v914, %v914
        %v933 = vpack.c.bf16 %v918, %v918
        %v934 = vpack.c.bf16 %v920, %v920
        %v935 = vpack.c.bf16 %v924, %v924
        %v936 = vpack.c.bf16 %v926, %v926
        %v937 = vld [vmem:[%s1] sm:$0x1]
        %v938 = vld [vmem:[%s1 + $0x1] sm:$0x1]
        %v939 = vld [vmem:[%s1 + $0x2] sm:$0x1]
        %v940 = vld [vmem:[%s1 + $0x3] sm:$0x1]
        %v941 = vld [vmem:[%s1 + $0x4] sm:$0x1]
        %v942 = vld [vmem:[%s1 + $0x5] sm:$0x1]
        %v943 = vld [vmem:[%s1 + $0x6] sm:$0x1]
        %v944 = vld [vmem:[%s1 + $0x7] sm:$0x1]
        %v953 = vperm.slane %v937, 0
        %v954 = vperm.slane %v938, 0
        %v955 = vperm.slane %v939, 0
        %v956 = vperm.slane %v940, 0
        %v957 = vperm.slane %v941, 0
        %v958 = vperm.slane %v942, 0
        %v959 = vperm.slane %v943, 0
        %v960 = vperm.slane %v944, 0
        %vm969 = vcmask 261120
        %v971 = vsel %vm969, %v873, 0
        %v974 = vsel %vm969, %v901, 0
        %976 = vmatpush.bf16.xpose.msra.mxu0 0
        %977 = vmatpush.bf16.xpose.msra.mxu0 0
        %978 = vmatpush.bf16.xpose.msra.mxu0 0
        %979 = vmatpush.bf16.xpose.msra.mxu0 0
        %980 = vmatpush.bf16.xpose.msra.mxu0 0
        %981 = vmatpush.bf16.xpose.msra.mxu0 0
        %982 = vmatpush.bf16.xpose.msra.mxu0 0
        %983 = vmatpush.bf16.xpose.msra.mxu0 %v974
        %984 = vmatmul.bf16.gmra.mxu0 %v971
        %v985 = vpop.f32.mrf.mxu0
        %v986 = vadd.f32 %v953, %v985
        %v987 = vpop.f32.mrf.mxu0
        %988 = vdwg.mxu0
        %v990 = vsel %vm969, %v874, 0
        %v993 = vsel %vm969, %v902, 0
        %995 = vmatpush.bf16.xpose.msra.mxu0 0
        %996 = vmatpush.bf16.xpose.msra.mxu0 0
        %997 = vmatpush.bf16.xpose.msra.mxu0 0
        %998 = vmatpush.bf16.xpose.msra.mxu0 0
        %999 = vmatpush.bf16.xpose.msra.mxu0 0
        %1000 = vmatpush.bf16.xpose.msra.mxu0 0
        %1001 = vmatpush.bf16.xpose.msra.mxu0 0
        %1002 = vmatpush.bf16.xpose.msra.mxu0 %v993
        %1003 = vmatmul.bf16.gmra.mxu0 %v990
        %v1004 = vpop.f32.mrf.mxu0
        %v1005 = vadd.f32 %v954, %v1004
        %v1006 = vpop.f32.mrf.mxu0
        %1007 = vdwg.mxu0
        %v1009 = vsel %vm969, %v875, 0
        %v1012 = vsel %vm969, %v903, 0
        %1014 = vmatpush.bf16.xpose.msra.mxu0 0
        %1015 = vmatpush.bf16.xpose.msra.mxu0 0
        %1016 = vmatpush.bf16.xpose.msra.mxu0 0
        %1017 = vmatpush.bf16.xpose.msra.mxu0 0
        %1018 = vmatpush.bf16.xpose.msra.mxu0 0
        %1019 = vmatpush.bf16.xpose.msra.mxu0 0
        %1020 = vmatpush.bf16.xpose.msra.mxu0 0
        %1021 = vmatpush.bf16.xpose.msra.mxu0 %v1012
        %1022 = vmatmul.bf16.gmra.mxu0 %v1009
        %v1023 = vpop.f32.mrf.mxu0
        %v1024 = vadd.f32 %v955, %v1023
        %v1025 = vpop.f32.mrf.mxu0
        %1026 = vdwg.mxu0
        %v1028 = vsel %vm969, %v876, 0
        %v1031 = vsel %vm969, %v904, 0
        %1033 = vmatpush.bf16.xpose.msra.mxu0 0
        %1034 = vmatpush.bf16.xpose.msra.mxu0 0
        %1035 = vmatpush.bf16.xpose.msra.mxu0 0
        %1036 = vmatpush.bf16.xpose.msra.mxu0 0
        %1037 = vmatpush.bf16.xpose.msra.mxu0 0
        %1038 = vmatpush.bf16.xpose.msra.mxu0 0
        %1039 = vmatpush.bf16.xpose.msra.mxu0 0
        %1040 = vmatpush.bf16.xpose.msra.mxu0 %v1031
        %1041 = vmatmul.bf16.gmra.mxu0 %v1028
        %v1042 = vpop.f32.mrf.mxu0
        %v1043 = vadd.f32 %v956, %v1042
        %v1044 = vpop.f32.mrf.mxu0
        %1045 = vdwg.mxu0
        %v1047 = vsel %vm969, %v877, 0
        %v1050 = vsel %vm969, %v905, 0
        %1052 = vmatpush.bf16.xpose.msra.mxu0 0
        %1053 = vmatpush.bf16.xpose.msra.mxu0 0
        %1054 = vmatpush.bf16.xpose.msra.mxu0 0
        %1055 = vmatpush.bf16.xpose.msra.mxu0 0
        %1056 = vmatpush.bf16.xpose.msra.mxu0 0
        %1057 = vmatpush.bf16.xpose.msra.mxu0 0
        %1058 = vmatpush.bf16.xpose.msra.mxu0 0
        %1059 = vmatpush.bf16.xpose.msra.mxu0 %v1050
        %1060 = vmatmul.bf16.gmra.mxu0 %v1047
        %v1061 = vpop.f32.mrf.mxu0
        %v1062 = vadd.f32 %v957, %v1061
        %v1063 = vpop.f32.mrf.mxu0
        %1064 = vdwg.mxu0
        %v1066 = vsel %vm969, %v878, 0
        %v1069 = vsel %vm969, %v906, 0
        %1071 = vmatpush.bf16.xpose.msra.mxu0 0
        %1072 = vmatpush.bf16.xpose.msra.mxu0 0
        %1073 = vmatpush.bf16.xpose.msra.mxu0 0
        %1074 = vmatpush.bf16.xpose.msra.mxu0 0
        %1075 = vmatpush.bf16.xpose.msra.mxu0 0
        %1076 = vmatpush.bf16.xpose.msra.mxu0 0
        %1077 = vmatpush.bf16.xpose.msra.mxu0 0
        %1078 = vmatpush.bf16.xpose.msra.mxu0 %v1069
        %1079 = vmatmul.bf16.gmra.mxu0 %v1066
        %v1080 = vpop.f32.mrf.mxu0
        %v1081 = vadd.f32 %v958, %v1080
        %v1082 = vpop.f32.mrf.mxu0
        %1083 = vdwg.mxu0
        %v1085 = vsel %vm969, %v879, 0
        %v1088 = vsel %vm969, %v907, 0
        %1090 = vmatpush.bf16.xpose.msra.mxu0 0
        %1091 = vmatpush.bf16.xpose.msra.mxu0 0
        %1092 = vmatpush.bf16.xpose.msra.mxu0 0
        %1093 = vmatpush.bf16.xpose.msra.mxu0 0
        %1094 = vmatpush.bf16.xpose.msra.mxu0 0
        %1095 = vmatpush.bf16.xpose.msra.mxu0 0
        %1096 = vmatpush.bf16.xpose.msra.mxu0 0
        %1097 = vmatpush.bf16.xpose.msra.mxu0 %v1088
        %1098 = vmatmul.bf16.gmra.mxu0 %v1085
        %v1099 = vpop.f32.mrf.mxu0
        %v1100 = vadd.f32 %v959, %v1099
        %v1101 = vpop.f32.mrf.mxu0
        %1102 = vdwg.mxu0
        %v1104 = vsel %vm969, %v880, 0
        %v1107 = vsel %vm969, %v908, 0
        %1109 = vmatpush.bf16.xpose.msra.mxu0 0
        %1110 = vmatpush.bf16.xpose.msra.mxu0 0
        %1111 = vmatpush.bf16.xpose.msra.mxu0 0
        %1112 = vmatpush.bf16.xpose.msra.mxu0 0
        %1113 = vmatpush.bf16.xpose.msra.mxu0 0
        %1114 = vmatpush.bf16.xpose.msra.mxu0 0
        %1115 = vmatpush.bf16.xpose.msra.mxu0 0
        %1116 = vmatpush.bf16.xpose.msra.mxu0 %v1107
        %1117 = vmatmul.bf16.gmra.mxu0 %v1104
        %v1118 = vpop.f32.mrf.mxu0
        %v1119 = vadd.f32 %v960, %v1118
        %v1120 = vpop.f32.mrf.mxu0
        %1121 = vdwg.mxu0
        %vm1122 = vcmask 64512
        %v1123 = vsel %vm1122, %v986, -inf
        %1124 = vmax.xlane.f32.xlu0 %v1123
        %v1125 = vpop.xlane.xlu0 %1124
        %v1126 = vsel %vm1122, %v1005, -inf
        %1127 = vmax.xlane.f32.xlu0 %v1126
        %v1128 = vpop.xlane.xlu0 %1127
        %v1129 = vsel %vm1122, %v1024, -inf
        %1130 = vmax.xlane.f32.xlu0 %v1129
        %v1131 = vpop.xlane.xlu0 %1130
        %v1132 = vsel %vm1122, %v1043, -inf
        %1133 = vmax.xlane.f32.xlu0 %v1132
        %v1134 = vpop.xlane.xlu0 %1133
        %v1135 = vsel %vm1122, %v1062, -inf
        %1136 = vmax.xlane.f32.xlu0 %v1135
        %v1137 = vpop.xlane.xlu0 %1136
        %v1138 = vsel %vm1122, %v1081, -inf
        %1139 = vmax.xlane.f32.xlu0 %v1138
        %v1140 = vpop.xlane.xlu0 %1139
        %v1141 = vsel %vm1122, %v1100, -inf
        %1142 = vmax.xlane.f32.xlu0 %v1141
        %v1143 = vpop.xlane.xlu0 %1142
        %v1144 = vsel %vm1122, %v1119, -inf
        %1145 = vmax.xlane.f32.xlu0 %v1144
        %v1146 = vpop.xlane.xlu0 %1145
        %v1147 = vsub.f32 %v986, %v1125
        %v1148 = vsub.f32 %v1005, %v1128
        %v1149 = vsub.f32 %v1024, %v1131
        %v1150 = vsub.f32 %v1043, %v1134
        %v1151 = vsub.f32 %v1062, %v1137
        %v1152 = vsub.f32 %v1081, %v1140
        %v1153 = vsub.f32 %v1100, %v1143
        %v1154 = vsub.f32 %v1119, %v1146
        %v1155 = vmul.f32 %v1147, 1.442695
        %v1156 = vpow.pop %v1155
        %v1157 = vmul.f32 %v1148, 1.442695
        %v1158 = vpow.pop %v1157
        %v1159 = vmul.f32 %v1149, 1.442695
        %v1160 = vpow.pop %v1159
        %v1161 = vmul.f32 %v1150, 1.442695
        %v1162 = vpow.pop %v1161
        %v1163 = vmul.f32 %v1151, 1.442695
        %v1164 = vpow.pop %v1163
        %v1165 = vmul.f32 %v1152, 1.442695
        %v1166 = vpow.pop %v1165
        %v1167 = vmul.f32 %v1153, 1.442695
        %v1168 = vpow.pop %v1167
        %v1169 = vmul.f32 %v1154, 1.442695
        %v1170 = vpow.pop %v1169
        %v1171 = vsel %vm1122, %v1156, 0.0
        %1172 = vadd.xlane.f32.xlu0 %v1171
        %v1173 = vpop.xlane.xlu0 %1172
        %v1174 = vsel %vm1122, %v1158, 0.0
        %1175 = vadd.xlane.f32.xlu0 %v1174
        %v1176 = vpop.xlane.xlu0 %1175
        %v1177 = vsel %vm1122, %v1160, 0.0
        %1178 = vadd.xlane.f32.xlu0 %v1177
        %v1179 = vpop.xlane.xlu0 %1178
        %v1180 = vsel %vm1122, %v1162, 0.0
        %1181 = vadd.xlane.f32.xlu0 %v1180
        %v1182 = vpop.xlane.xlu0 %1181
        %v1183 = vsel %vm1122, %v1164, 0.0
        %1184 = vadd.xlane.f32.xlu0 %v1183
        %v1185 = vpop.xlane.xlu0 %1184
        %v1186 = vsel %vm1122, %v1166, 0.0
        %1187 = vadd.xlane.f32.xlu0 %v1186
        %v1188 = vpop.xlane.xlu0 %1187
        %v1189 = vsel %vm1122, %v1168, 0.0
        %1190 = vadd.xlane.f32.xlu0 %v1189
        %v1191 = vpop.xlane.xlu0 %1190
        %v1192 = vsel %vm1122, %v1170, 0.0
        %1193 = vadd.xlane.f32.xlu0 %v1192
        %v1194 = vpop.xlane.xlu0 %1193
        %v1195 = vpack.c.bf16 %v1156, %v1156
        %v1196 = vpack.c.bf16 %v1158, %v1158
        %v1197 = vpack.c.bf16 %v1160, %v1160
        %v1198 = vpack.c.bf16 %v1162, %v1162
        %v1199 = vpack.c.bf16 %v1164, %v1164
        %v1200 = vpack.c.bf16 %v1166, %v1166
        %v1201 = vpack.c.bf16 %v1168, %v1168
        %v1202 = vpack.c.bf16 %v1170, %v1170
        %v1204 = vsel %vm1122, %v1195, 0
        %vm1206 = vcmask 1043456
        %v1208 = vsel %vm1206, %v929, 0
        %1210 = vmatpush.bf16.msra.mxu0 0
        %1211 = vmatpush.bf16.msra.mxu0 0
        %1212 = vmatpush.bf16.msra.mxu0 0
        %1213 = vmatpush.bf16.msra.mxu0 0
        %1214 = vmatpush.bf16.msra.mxu0 0
        %1215 = vmatpush.bf16.msra.mxu0 0
        %1216 = vmatpush.bf16.msra.mxu0 0
        %1217 = vmatpush.bf16.msra.mxu0 %v1208
        %1218 = vmatmul.bf16.gmra.mxu0 %v1204
        %v1219 = vpop.f32.mrf.mxu0
        %v1220 = vadd.f32 0.0, %v1219
        %v1221 = vpop.f32.mrf.mxu0
        %1222 = vdwg.mxu0
        %v1224 = vsel %vm1122, %v1196, 0
        %v1227 = vsel %vm1206, %v930, 0
        %1229 = vmatpush.bf16.msra.mxu0 0
        %1230 = vmatpush.bf16.msra.mxu0 0
        %1231 = vmatpush.bf16.msra.mxu0 0
        %1232 = vmatpush.bf16.msra.mxu0 0
        %1233 = vmatpush.bf16.msra.mxu0 0
        %1234 = vmatpush.bf16.msra.mxu0 0
        %1235 = vmatpush.bf16.msra.mxu0 0
        %1236 = vmatpush.bf16.msra.mxu0 %v1227
        %1237 = vmatmul.bf16.gmra.mxu0 %v1224
        %v1238 = vpop.f32.mrf.mxu0
        %v1239 = vadd.f32 0.0, %v1238
        %v1240 = vpop.f32.mrf.mxu0
        %1241 = vdwg.mxu0
        %v1243 = vsel %vm1122, %v1197, 0
        %v1246 = vsel %vm1206, %v931, 0
        %1248 = vmatpush.bf16.msra.mxu0 0
        %1249 = vmatpush.bf16.msra.mxu0 0
        %1250 = vmatpush.bf16.msra.mxu0 0
        %1251 = vmatpush.bf16.msra.mxu0 0
        %1252 = vmatpush.bf16.msra.mxu0 0
        %1253 = vmatpush.bf16.msra.mxu0 0
        %1254 = vmatpush.bf16.msra.mxu0 0
        %1255 = vmatpush.bf16.msra.mxu0 %v1246
        %1256 = vmatmul.bf16.gmra.mxu0 %v1243
        %v1257 = vpop.f32.mrf.mxu0
        %v1258 = vadd.f32 0.0, %v1257
        %v1259 = vpop.f32.mrf.mxu0
        %1260 = vdwg.mxu0
        %v1262 = vsel %vm1122, %v1198, 0
        %v1265 = vsel %vm1206, %v932, 0
        %1267 = vmatpush.bf16.msra.mxu0 0
        %1268 = vmatpush.bf16.msra.mxu0 0
        %1269 = vmatpush.bf16.msra.mxu0 0
        %1270 = vmatpush.bf16.msra.mxu0 0
        %1271 = vmatpush.bf16.msra.mxu0 0
        %1272 = vmatpush.bf16.msra.mxu0 0
        %1273 = vmatpush.bf16.msra.mxu0 0
        %1274 = vmatpush.bf16.msra.mxu0 %v1265
        %1275 = vmatmul.bf16.gmra.mxu0 %v1262
        %v1276 = vpop.f32.mrf.mxu0
        %v1277 = vadd.f32 0.0, %v1276
        %v1278 = vpop.f32.mrf.mxu0
        %1279 = vdwg.mxu0
        %v1281 = vsel %vm1122, %v1199, 0
        %v1284 = vsel %vm1206, %v933, 0
        %1286 = vmatpush.bf16.msra.mxu0 0
        %1287 = vmatpush.bf16.msra.mxu0 0
        %1288 = vmatpush.bf16.msra.mxu0 0
        %1289 = vmatpush.bf16.msra.mxu0 0
        %1290 = vmatpush.bf16.msra.mxu0 0
        %1291 = vmatpush.bf16.msra.mxu0 0
        %1292 = vmatpush.bf16.msra.mxu0 0
        %1293 = vmatpush.bf16.msra.mxu0 %v1284
        %1294 = vmatmul.bf16.gmra.mxu0 %v1281
        %v1295 = vpop.f32.mrf.mxu0
        %v1296 = vadd.f32 0.0, %v1295
        %v1297 = vpop.f32.mrf.mxu0
        %1298 = vdwg.mxu0
        %v1300 = vsel %vm1122, %v1200, 0
        %v1303 = vsel %vm1206, %v934, 0
        %1305 = vmatpush.bf16.msra.mxu0 0
        %1306 = vmatpush.bf16.msra.mxu0 0
        %1307 = vmatpush.bf16.msra.mxu0 0
        %1308 = vmatpush.bf16.msra.mxu0 0
        %1309 = vmatpush.bf16.msra.mxu0 0
        %1310 = vmatpush.bf16.msra.mxu0 0
        %1311 = vmatpush.bf16.msra.mxu0 0
        %1312 = vmatpush.bf16.msra.mxu0 %v1303
        %1313 = vmatmul.bf16.gmra.mxu0 %v1300
        %v1314 = vpop.f32.mrf.mxu0
        %v1315 = vadd.f32 0.0, %v1314
        %v1316 = vpop.f32.mrf.mxu0
        %1317 = vdwg.mxu0
        %v1319 = vsel %vm1122, %v1201, 0
        %v1322 = vsel %vm1206, %v935, 0
        %1324 = vmatpush.bf16.msra.mxu0 0
        %1325 = vmatpush.bf16.msra.mxu0 0
        %1326 = vmatpush.bf16.msra.mxu0 0
        %1327 = vmatpush.bf16.msra.mxu0 0
        %1328 = vmatpush.bf16.msra.mxu0 0
        %1329 = vmatpush.bf16.msra.mxu0 0
        %1330 = vmatpush.bf16.msra.mxu0 0
        %1331 = vmatpush.bf16.msra.mxu0 %v1322
        %1332 = vmatmul.bf16.gmra.mxu0 %v1319
        %v1333 = vpop.f32.mrf.mxu0
        %v1334 = vadd.f32 0.0, %v1333
        %v1335 = vpop.f32.mrf.mxu0
        %1336 = vdwg.mxu0
        %v1338 = vsel %vm1122, %v1202, 0
        %v1341 = vsel %vm1206, %v936, 0
        %1343 = vmatpush.bf16.msra.mxu0 0
        %1344 = vmatpush.bf16.msra.mxu0 0
        %1345 = vmatpush.bf16.msra.mxu0 0
        %1346 = vmatpush.bf16.msra.mxu0 0
        %1347 = vmatpush.bf16.msra.mxu0 0
        %1348 = vmatpush.bf16.msra.mxu0 0
        %1349 = vmatpush.bf16.msra.mxu0 0
        %1350 = vmatpush.bf16.msra.mxu0 %v1341
        %1351 = vmatmul.bf16.gmra.mxu0 %v1338
        %v1352 = vpop.f32.mrf.mxu0
        %v1353 = vadd.f32 0.0, %v1352
        %v1354 = vpop.f32.mrf.mxu0
        %1355 = vdwg.mxu0
        %v1356 = vrcp.pop %v1173
        %v1357 = vrcp.pop %v1176
        %v1358 = vrcp.pop %v1179
        %v1359 = vrcp.pop %v1182
        %v1360 = vrcp.pop %v1185
        %v1361 = vrcp.pop %v1188
        %v1362 = vrcp.pop %v1191
        %v1363 = vrcp.pop %v1194
        %v1364 = vmul.f32 %v1220, %v1356
        %v1365 = vmul.f32 %v1239, %v1357
        %v1366 = vmul.f32 %v1258, %v1358
        %v1367 = vmul.f32 %v1277, %v1359
        %v1368 = vmul.f32 %v1296, %v1360
        %v1369 = vmul.f32 %v1315, %v1361
        %v1370 = vmul.f32 %v1334, %v1362
        %v1371 = vmul.f32 %v1353, %v1363
        %1374 = vrot.lane.b32.xlu0 %v1366, 32
        %v1375 = vpop.permute.xlu0 %1374
        %1376 = vrot.lane.b32.xlu0 %v1367, 32
        %v1377 = vpop.permute.xlu0 %1376
        %1382 = vrot.lane.b32.xlu0 %v1368, 64
        %v1383 = vpop.permute.xlu0 %1382
        %1384 = vrot.lane.b32.xlu0 %v1369, 64
        %v1385 = vpop.permute.xlu0 %1384
        %1390 = vrot.lane.b32.xlu0 %v1370, 96
        %v1391 = vpop.permute.xlu0 %1390
        %1392 = vrot.lane.b32.xlu0 %v1371, 96
        %v1393 = vpop.permute.xlu0 %1392
        %v1396 = vsel %vm969, %v1364, %v1375
        %v1397 = vsel %vm969, %v1365, %v1377
        %vm1398 = vcmask 523264
        %v1399 = vsel %vm1398, %v1396, %v1383
        %v1400 = vsel %vm1398, %v1397, %v1385
        %vm1401 = vcmask 785408
        %v1402 = vsel %vm1401, %v1399, %v1391
        %v1403 = vsel %vm1401, %v1400, %v1393
        %v1404 = vpack.c.bf16 %v1403, %v1402
        %v1405 = vld [vmem:[%s477] sm:$0xf]
        %v1406 = vld [vmem:[%s477 + $0x4] sm:$0xf]
        %v1407 = vld [vmem:[%s477 + $0x8] sm:$0xf]
        %v1408 = vld [vmem:[%s477 + $0xc] sm:$0xf]
        %v1409 = vld [vmem:[%s477 + $0x10] sm:$0xf]
        %v1410 = vld [vmem:[%s477 + $0x14] sm:$0xf]
        %v1411 = vld [vmem:[%s477 + $0x18] sm:$0xf]
        %v1412 = vld [vmem:[%s477 + $0x1c] sm:$0xf]
        %v1413 = vld [vmem:[%s477 + $0x20] sm:$0xf]
        %v1414 = vld [vmem:[%s477 + $0x24] sm:$0xf]
        %v1415 = vld [vmem:[%s477 + $0x28] sm:$0xf]
        %v1416 = vld [vmem:[%s477 + $0x2c] sm:$0xf]
        %v1417 = vld [vmem:[%s477 + $0x30] sm:$0xf]
        %v1418 = vld [vmem:[%s477 + $0x34] sm:$0xf]
        %v1419 = vld [vmem:[%s477 + $0x38] sm:$0xf]
        %v1420 = vld [vmem:[%s477 + $0x3c] sm:$0xf]
        %v1421 = vperm.slane %v642, 0
        %v1438 = vunpack.c.l.b16 %v1405
        %v1439 = vunpack.c.l.b16 %v1406
        %v1440 = vunpack.c.l.b16 %v1407
        %v1441 = vunpack.c.l.b16 %v1408
        %v1442 = vunpack.c.l.b16 %v1409
        %v1443 = vunpack.c.l.b16 %v1410
        %v1444 = vunpack.c.l.b16 %v1411
        %v1445 = vunpack.c.l.b16 %v1412
        %v1446 = vunpack.c.l.b16 %v1413
        %v1447 = vunpack.c.l.b16 %v1414
        %v1448 = vunpack.c.l.b16 %v1415
        %v1449 = vunpack.c.l.b16 %v1416
        %v1450 = vunpack.c.l.b16 %v1417
        %v1451 = vunpack.c.l.b16 %v1418
        %v1452 = vunpack.c.l.b16 %v1419
        %v1453 = vunpack.c.l.b16 %v1420
        %v1454 = vpack.c.b16 %v1439, %v1438
        %v1455 = vpack.c.b16 %v1441, %v1440
        %v1456 = vpack.c.b16 %v1443, %v1442
        %v1457 = vpack.c.b16 %v1445, %v1444
        %v1458 = vpack.c.b16 %v1447, %v1446
        %v1459 = vpack.c.b16 %v1449, %v1448
        %v1460 = vpack.c.b16 %v1451, %v1450
        %v1461 = vpack.c.b16 %v1453, %v1452
        %1470 = vmatpush.bf16.msra.mxu0 %v1461
        %1471 = vmatpush.bf16.msra.mxu0 %v1460
        %1472 = vmatpush.bf16.msra.mxu0 %v1459
        %1473 = vmatpush.bf16.msra.mxu0 %v1458
        %1474 = vmatpush.bf16.msra.mxu0 %v1457
        %1475 = vmatpush.bf16.msra.mxu0 %v1456
        %1476 = vmatpush.bf16.msra.mxu0 %v1455
        %1477 = vmatpush.bf16.msra.mxu0 %v1454
        %1478 = vmatmul.bf16.gmra.mxu0 %v1404
        %v1479 = vpop.f32.mrf.mxu0
        %v1480 = vadd.f32 %v1421, %v1479
        %v1481 = vpop.f32.mrf.mxu0
        %v1482 = vadd.f32 %v1421, %v1481
        %1483 = vdwg.mxu0
        %v1484 = vadd.f32 %v639, %v1480
        %v1485 = vadd.f32 %v640, %v1482
        %1486 = vadd.xlane.f32.xlu0 %v1484
        %v1487 = vpop.xlane.xlu0 %1486
        %1488 = vadd.xlane.f32.xlu0 %v1485
        %v1489 = vpop.xlane.xlu0 %1488
        %v1490 = vrcp.pop 128.0
        %v1491 = vmul.f32 128.0, %v1490
        %v1492 = vsub.f32 1.0, %v1491
        %v1493 = vmul.f32 %v1490, %v1492
        %v1494 = vadd.f32 %v1490, %v1493
        %vm1495 = vweird.f32 %v1490
        %v1496 = vsel %vm1495, %v1490, %v1494
        %v1497 = vmul.f32 %v1487, %v1496
        %v1498 = vmul.f32 %v1489, %v1496
        %v1499 = vsub.f32 %v1484, %v1497
        %v1500 = vsub.f32 %v1485, %v1498
        %v1501 = vmul.f32 %v1499, %v1499
        %v1502 = vmul.f32 %v1500, %v1500
        %1503 = vadd.xlane.f32.xlu0 %v1501
        %v1504 = vpop.xlane.xlu0 %1503
        %1505 = vadd.xlane.f32.xlu0 %v1502
        %v1506 = vpop.xlane.xlu0 %1505
        %v1507 = vmul.f32 %v1504, %v1496
        %v1508 = vmul.f32 %v1506, %v1496
        %v1509 = vadd.f32 %v1507, 1e-12
        %v1510 = vadd.f32 %v1508, 1e-12
        %v1511 = vrsqrt.pop %v1509
        %v1512 = vmul.f32 %v1511, %v1509
        %v1513 = vmul.f32 %v1512, %v1511
        %v1514 = vmul.f32 0.5, %v1513
        %v1515 = vsub.f32 1.5, %v1514
        %v1516 = vmul.f32 %v1511, %v1515
        %vm1517 = vweird.f32 %v1509
        %vm1518 = vweird.f32 %v1511
        %vm1519 = vmor %vm1517, %vm1518
        %v1520 = vsel %vm1519, %v1511, %v1516
        %v1521 = vrsqrt.pop %v1510
        %v1522 = vmul.f32 %v1521, %v1510
        %v1523 = vmul.f32 %v1522, %v1521
        %v1524 = vmul.f32 0.5, %v1523
        %v1525 = vsub.f32 1.5, %v1524
        %v1526 = vmul.f32 %v1521, %v1525
        %vm1527 = vweird.f32 %v1510
        %vm1528 = vweird.f32 %v1521
        %vm1529 = vmor %vm1527, %vm1528
        %v1530 = vsel %vm1529, %v1521, %v1526
        %v1531 = vmul.f32 %v1499, %v1520
        %v1532 = vmul.f32 %v1500, %v1530
        %v1533 = vperm.slane %v642, 1
        %v1534 = vmul.f32 %v1531, %v1533
        %v1535 = vmul.f32 %v1532, %v1533
        %v1536 = vperm.slane %v642, 2
        %v1537 = vadd.f32 %v1534, %v1536
        %v1538 = vadd.f32 %v1535, %v1536
        %v1539 = vpack.c.bf16 %v1538, %v1537
        %v1540 = vld [vmem:[%s487] sm:$0xff]
        %v1541 = vld [vmem:[%s487 + $0x8] sm:$0xff]
        %v1542 = vld [vmem:[%s487 + $0x10] sm:$0xff]
        %v1543 = vld [vmem:[%s487 + $0x18] sm:$0xff]
        %v1544 = vld [vmem:[%s487 + $0x20] sm:$0xff]
        %v1545 = vld [vmem:[%s487 + $0x28] sm:$0xff]
        %v1546 = vld [vmem:[%s487 + $0x30] sm:$0xff]
        %v1547 = vld [vmem:[%s487 + $0x38] sm:$0xff]
        %v1548 = vld [vmem:[%s487 + $0x40] sm:$0xff]
        %v1549 = vld [vmem:[%s487 + $0x48] sm:$0xff]
        %v1550 = vld [vmem:[%s487 + $0x50] sm:$0xff]
        %v1551 = vld [vmem:[%s487 + $0x58] sm:$0xff]
        %v1552 = vld [vmem:[%s487 + $0x60] sm:$0xff]
        %v1553 = vld [vmem:[%s487 + $0x68] sm:$0xff]
        %v1554 = vld [vmem:[%s487 + $0x70] sm:$0xff]
        %v1555 = vld [vmem:[%s487 + $0x78] sm:$0xff]
        %v1556 = vld [vmem:[%s487 + $0x80] sm:$0xff]
        %v1557 = vld [vmem:[%s487 + $0x88] sm:$0xff]
        %v1558 = vld [vmem:[%s487 + $0x90] sm:$0xff]
        %v1559 = vld [vmem:[%s487 + $0x98] sm:$0xff]
        %v1560 = vld [vmem:[%s487 + $0xa0] sm:$0xff]
        %v1561 = vld [vmem:[%s487 + $0xa8] sm:$0xff]
        %v1562 = vld [vmem:[%s487 + $0xb0] sm:$0xff]
        %v1563 = vld [vmem:[%s487 + $0xb8] sm:$0xff]
        %v1564 = vld [vmem:[%s487 + $0xc0] sm:$0xff]
        %v1565 = vld [vmem:[%s487 + $0xc8] sm:$0xff]
        %v1566 = vld [vmem:[%s487 + $0xd0] sm:$0xff]
        %v1567 = vld [vmem:[%s487 + $0xd8] sm:$0xff]
        %v1568 = vld [vmem:[%s487 + $0xe0] sm:$0xff]
        %v1569 = vld [vmem:[%s487 + $0xe8] sm:$0xff]
        %v1570 = vld [vmem:[%s487 + $0xf0] sm:$0xff]
        %v1571 = vld [vmem:[%s487 + $0xf8] sm:$0xff]
        %v1572 = vld [vmem:[%s571] sm:$0xf]
        %v1574 = vperm.slane %v1572, 0
        %v1575 = vperm.slane %v1572, 1
        %v1576 = vperm.slane %v1572, 2
        %v1577 = vperm.slane %v1572, 3
        %v1614 = vunpack.c.l.b16 %v1540
        %v1615 = vunpack.c.h.b16 %v1540
        %v1616 = vunpack.c.l.b16 %v1541
        %v1617 = vunpack.c.h.b16 %v1541
        %v1618 = vunpack.c.l.b16 %v1542
        %v1619 = vunpack.c.h.b16 %v1542
        %v1620 = vunpack.c.l.b16 %v1543
        %v1621 = vunpack.c.h.b16 %v1543
        %v1622 = vunpack.c.l.b16 %v1544
        %v1623 = vunpack.c.h.b16 %v1544
        %v1624 = vunpack.c.l.b16 %v1545
        %v1625 = vunpack.c.h.b16 %v1545
        %v1626 = vunpack.c.l.b16 %v1546
        %v1627 = vunpack.c.h.b16 %v1546
        %v1628 = vunpack.c.l.b16 %v1547
        %v1629 = vunpack.c.h.b16 %v1547
        %v1630 = vunpack.c.l.b16 %v1548
        %v1631 = vunpack.c.h.b16 %v1548
        %v1632 = vunpack.c.l.b16 %v1549
        %v1633 = vunpack.c.h.b16 %v1549
        %v1634 = vunpack.c.l.b16 %v1550
        %v1635 = vunpack.c.h.b16 %v1550
        %v1636 = vunpack.c.l.b16 %v1551
        %v1637 = vunpack.c.h.b16 %v1551
        %v1638 = vunpack.c.l.b16 %v1552
        %v1639 = vunpack.c.h.b16 %v1552
        %v1640 = vunpack.c.l.b16 %v1553
        %v1641 = vunpack.c.h.b16 %v1553
        %v1642 = vunpack.c.l.b16 %v1554
        %v1643 = vunpack.c.h.b16 %v1554
        %v1644 = vunpack.c.l.b16 %v1555
        %v1645 = vunpack.c.h.b16 %v1555
        %v1646 = vunpack.c.l.b16 %v1556
        %v1647 = vunpack.c.h.b16 %v1556
        %v1648 = vunpack.c.l.b16 %v1557
        %v1649 = vunpack.c.h.b16 %v1557
        %v1650 = vunpack.c.l.b16 %v1558
        %v1651 = vunpack.c.h.b16 %v1558
        %v1652 = vunpack.c.l.b16 %v1559
        %v1653 = vunpack.c.h.b16 %v1559
        %v1654 = vunpack.c.l.b16 %v1560
        %v1655 = vunpack.c.h.b16 %v1560
        %v1656 = vunpack.c.l.b16 %v1561
        %v1657 = vunpack.c.h.b16 %v1561
        %v1658 = vunpack.c.l.b16 %v1562
        %v1659 = vunpack.c.h.b16 %v1562
        %v1660 = vunpack.c.l.b16 %v1563
        %v1661 = vunpack.c.h.b16 %v1563
        %v1662 = vunpack.c.l.b16 %v1564
        %v1663 = vunpack.c.h.b16 %v1564
        %v1664 = vunpack.c.l.b16 %v1565
        %v1665 = vunpack.c.h.b16 %v1565
        %v1666 = vunpack.c.l.b16 %v1566
        %v1667 = vunpack.c.h.b16 %v1566
        %v1668 = vunpack.c.l.b16 %v1567
        %v1669 = vunpack.c.h.b16 %v1567
        %v1670 = vunpack.c.l.b16 %v1568
        %v1671 = vunpack.c.h.b16 %v1568
        %v1672 = vunpack.c.l.b16 %v1569
        %v1673 = vunpack.c.h.b16 %v1569
        %v1674 = vunpack.c.l.b16 %v1570
        %v1675 = vunpack.c.h.b16 %v1570
        %v1676 = vunpack.c.l.b16 %v1571
        %v1677 = vunpack.c.h.b16 %v1571
        %v1678 = vpack.c.b16 %v1618, %v1614
        %v1679 = vpack.c.b16 %v1619, %v1615
        %v1680 = vpack.c.b16 %v1620, %v1616
        %v1681 = vpack.c.b16 %v1621, %v1617
        %v1682 = vpack.c.b16 %v1626, %v1622
        %v1683 = vpack.c.b16 %v1627, %v1623
        %v1684 = vpack.c.b16 %v1628, %v1624
        %v1685 = vpack.c.b16 %v1629, %v1625
        %v1686 = vpack.c.b16 %v1634, %v1630
        %v1687 = vpack.c.b16 %v1635, %v1631
        %v1688 = vpack.c.b16 %v1636, %v1632
        %v1689 = vpack.c.b16 %v1637, %v1633
        %v1690 = vpack.c.b16 %v1642, %v1638
        %v1691 = vpack.c.b16 %v1643, %v1639
        %v1692 = vpack.c.b16 %v1644, %v1640
        %v1693 = vpack.c.b16 %v1645, %v1641
        %v1694 = vpack.c.b16 %v1650, %v1646
        %v1695 = vpack.c.b16 %v1651, %v1647
        %v1696 = vpack.c.b16 %v1652, %v1648
        %v1697 = vpack.c.b16 %v1653, %v1649
        %v1698 = vpack.c.b16 %v1658, %v1654
        %v1699 = vpack.c.b16 %v1659, %v1655
        %v1700 = vpack.c.b16 %v1660, %v1656
        %v1701 = vpack.c.b16 %v1661, %v1657
        %v1702 = vpack.c.b16 %v1666, %v1662
        %v1703 = vpack.c.b16 %v1667, %v1663
        %v1704 = vpack.c.b16 %v1668, %v1664
        %v1705 = vpack.c.b16 %v1669, %v1665
        %v1706 = vpack.c.b16 %v1674, %v1670
        %v1707 = vpack.c.b16 %v1675, %v1671
        %v1708 = vpack.c.b16 %v1676, %v1672
        %v1709 = vpack.c.b16 %v1677, %v1673
        %1742 = vmatpush.bf16.msra.mxu0 %v1706
        %1743 = vmatpush.bf16.msra.mxu0 %v1702
        %1744 = vmatpush.bf16.msra.mxu0 %v1698
        %1745 = vmatpush.bf16.msra.mxu0 %v1694
        %1746 = vmatpush.bf16.msra.mxu0 %v1690
        %1747 = vmatpush.bf16.msra.mxu0 %v1686
        %1748 = vmatpush.bf16.msra.mxu0 %v1682
        %1749 = vmatpush.bf16.msra.mxu0 %v1678
        %1750 = vmatmul.bf16.gmra.mxu0 %v1539
        %v1751 = vpop.f32.mrf.mxu0
        %v1752 = vadd.f32 %v1574, %v1751
        %v1753 = vpop.f32.mrf.mxu0
        %v1754 = vadd.f32 %v1574, %v1753
        %1755 = vdwg.mxu0
        %1756 = vmatpush.bf16.msra.mxu0 %v1707
        %1757 = vmatpush.bf16.msra.mxu0 %v1703
        %1758 = vmatpush.bf16.msra.mxu0 %v1699
        %1759 = vmatpush.bf16.msra.mxu0 %v1695
        %1760 = vmatpush.bf16.msra.mxu0 %v1691
        %1761 = vmatpush.bf16.msra.mxu0 %v1687
        %1762 = vmatpush.bf16.msra.mxu0 %v1683
        %1763 = vmatpush.bf16.msra.mxu0 %v1679
        %1764 = vmatmul.bf16.gmra.mxu0 %v1539
        %v1765 = vpop.f32.mrf.mxu0
        %v1766 = vadd.f32 %v1575, %v1765
        %v1767 = vpop.f32.mrf.mxu0
        %v1768 = vadd.f32 %v1575, %v1767
        %1769 = vdwg.mxu0
        %1770 = vmatpush.bf16.msra.mxu0 %v1708
        %1771 = vmatpush.bf16.msra.mxu0 %v1704
        %1772 = vmatpush.bf16.msra.mxu0 %v1700
        %1773 = vmatpush.bf16.msra.mxu0 %v1696
        %1774 = vmatpush.bf16.msra.mxu0 %v1692
        %1775 = vmatpush.bf16.msra.mxu0 %v1688
        %1776 = vmatpush.bf16.msra.mxu0 %v1684
        %1777 = vmatpush.bf16.msra.mxu0 %v1680
        %1778 = vmatmul.bf16.gmra.mxu0 %v1539
        %v1779 = vpop.f32.mrf.mxu0
        %v1780 = vadd.f32 %v1576, %v1779
        %v1781 = vpop.f32.mrf.mxu0
        %v1782 = vadd.f32 %v1576, %v1781
        %1783 = vdwg.mxu0
        %1784 = vmatpush.bf16.msra.mxu0 %v1709
        %1785 = vmatpush.bf16.msra.mxu0 %v1705
        %1786 = vmatpush.bf16.msra.mxu0 %v1701
        %1787 = vmatpush.bf16.msra.mxu0 %v1697
        %1788 = vmatpush.bf16.msra.mxu0 %v1693
        %1789 = vmatpush.bf16.msra.mxu0 %v1689
        %1790 = vmatpush.bf16.msra.mxu0 %v1685
        %1791 = vmatpush.bf16.msra.mxu0 %v1681
        %1792 = vmatmul.bf16.gmra.mxu0 %v1539
        %v1793 = vpop.f32.mrf.mxu0
        %v1794 = vadd.f32 %v1577, %v1793
        %v1795 = vpop.f32.mrf.mxu0
        %v1796 = vadd.f32 %v1577, %v1795
        %1797 = vdwg.mxu0
        %v1798 = vmul.f32 %v1752, %v1752
        %v1799 = vmul.f32 %v1766, %v1766
        %v1800 = vmul.f32 %v1780, %v1780
        %v1801 = vmul.f32 %v1794, %v1794
        %v1802 = vmul.f32 %v1754, %v1754
        %v1803 = vmul.f32 %v1768, %v1768
        %v1804 = vmul.f32 %v1782, %v1782
        %v1805 = vmul.f32 %v1796, %v1796
        %v1806 = vmul.f32 %v1752, %v1798
        %v1807 = vmul.f32 %v1766, %v1799
        %v1808 = vmul.f32 %v1780, %v1800
        %v1809 = vmul.f32 %v1794, %v1801
        %v1810 = vmul.f32 %v1754, %v1802
        %v1811 = vmul.f32 %v1768, %v1803
        %v1812 = vmul.f32 %v1782, %v1804
        %v1813 = vmul.f32 %v1796, %v1805
        %v1814 = vmul.f32 %v1806, 0.044715
        %v1815 = vmul.f32 %v1807, 0.044715
        %v1816 = vmul.f32 %v1808, 0.044715
        %v1817 = vmul.f32 %v1809, 0.044715
        %v1818 = vmul.f32 %v1810, 0.044715
        %v1819 = vmul.f32 %v1811, 0.044715
        %v1820 = vmul.f32 %v1812, 0.044715
        %v1821 = vmul.f32 %v1813, 0.044715
        %v1822 = vadd.f32 %v1752, %v1814
        %v1823 = vadd.f32 %v1766, %v1815
        %v1824 = vadd.f32 %v1780, %v1816
        %v1825 = vadd.f32 %v1794, %v1817
        %v1826 = vadd.f32 %v1754, %v1818
        %v1827 = vadd.f32 %v1768, %v1819
        %v1828 = vadd.f32 %v1782, %v1820
        %v1829 = vadd.f32 %v1796, %v1821
        %v1830 = vmul.f32 %v1822, 0.7978846
        %v1831 = vmul.f32 %v1823, 0.7978846
        %v1832 = vmul.f32 %v1824, 0.7978846
        %v1833 = vmul.f32 %v1825, 0.7978846
        %v1834 = vmul.f32 %v1826, 0.7978846
        %v1835 = vmul.f32 %v1827, 0.7978846
        %v1836 = vmul.f32 %v1828, 0.7978846
        %v1837 = vmul.f32 %v1829, 0.7978846
        %v1838 = vtanh.pop %v1830
        %v1839 = vtanh.pop %v1831
        %v1840 = vtanh.pop %v1832
        %v1841 = vtanh.pop %v1833
        %v1842 = vtanh.pop %v1834
        %v1843 = vtanh.pop %v1835
        %v1844 = vtanh.pop %v1836
        %v1845 = vtanh.pop %v1837
        %v1846 = vadd.f32 %v1838, 1.0
        %v1847 = vadd.f32 %v1839, 1.0
        %v1848 = vadd.f32 %v1840, 1.0
        %v1849 = vadd.f32 %v1841, 1.0
        %v1850 = vadd.f32 %v1842, 1.0
        %v1851 = vadd.f32 %v1843, 1.0
        %v1852 = vadd.f32 %v1844, 1.0
        %v1853 = vadd.f32 %v1845, 1.0
        %v1854 = vmul.f32 %v1846, 0.5
        %v1855 = vmul.f32 %v1847, 0.5
        %v1856 = vmul.f32 %v1848, 0.5
        %v1857 = vmul.f32 %v1849, 0.5
        %v1858 = vmul.f32 %v1850, 0.5
        %v1859 = vmul.f32 %v1851, 0.5
        %v1860 = vmul.f32 %v1852, 0.5
        %v1861 = vmul.f32 %v1853, 0.5
        %v1862 = vmul.f32 %v1752, %v1854
        %v1863 = vmul.f32 %v1766, %v1855
        %v1864 = vmul.f32 %v1780, %v1856
        %v1865 = vmul.f32 %v1794, %v1857
        %v1866 = vmul.f32 %v1754, %v1858
        %v1867 = vmul.f32 %v1768, %v1859
        %v1868 = vmul.f32 %v1782, %v1860
        %v1869 = vmul.f32 %v1796, %v1861
        %v1870 = vpack.c.bf16 %v1866, %v1862
        %v1871 = vpack.c.bf16 %v1867, %v1863
        %v1872 = vpack.c.bf16 %v1868, %v1864
        %v1873 = vpack.c.bf16 %v1869, %v1865
        %v1874 = vld [vmem:[%s497] sm:$0xf]
        %v1875 = vld [vmem:[%s497 + $0x4] sm:$0xf]
        %v1876 = vld [vmem:[%s497 + $0x8] sm:$0xf]
        %v1877 = vld [vmem:[%s497 + $0xc] sm:$0xf]
        %v1878 = vld [vmem:[%s497 + $0x10] sm:$0xf]
        %v1879 = vld [vmem:[%s497 + $0x14] sm:$0xf]
        %v1880 = vld [vmem:[%s497 + $0x18] sm:$0xf]
        %v1881 = vld [vmem:[%s497 + $0x1c] sm:$0xf]
        %v1882 = vld [vmem:[%s497 + $0x20] sm:$0xf]
        %v1883 = vld [vmem:[%s497 + $0x24] sm:$0xf]
        %v1884 = vld [vmem:[%s497 + $0x28] sm:$0xf]
        %v1885 = vld [vmem:[%s497 + $0x2c] sm:$0xf]
        %v1886 = vld [vmem:[%s497 + $0x30] sm:$0xf]
        %v1887 = vld [vmem:[%s497 + $0x34] sm:$0xf]
        %v1888 = vld [vmem:[%s497 + $0x38] sm:$0xf]
        %v1889 = vld [vmem:[%s497 + $0x3c] sm:$0xf]
        %v1890 = vld [vmem:[%s497 + $0x40] sm:$0xf]
        %v1891 = vld [vmem:[%s497 + $0x44] sm:$0xf]
        %v1892 = vld [vmem:[%s497 + $0x48] sm:$0xf]
        %v1893 = vld [vmem:[%s497 + $0x4c] sm:$0xf]
        %v1894 = vld [vmem:[%s497 + $0x50] sm:$0xf]
        %v1895 = vld [vmem:[%s497 + $0x54] sm:$0xf]
        %v1896 = vld [vmem:[%s497 + $0x58] sm:$0xf]
        %v1897 = vld [vmem:[%s497 + $0x5c] sm:$0xf]
        %v1898 = vld [vmem:[%s497 + $0x60] sm:$0xf]
        %v1899 = vld [vmem:[%s497 + $0x64] sm:$0xf]
        %v1900 = vld [vmem:[%s497 + $0x68] sm:$0xf]
        %v1901 = vld [vmem:[%s497 + $0x6c] sm:$0xf]
        %v1902 = vld [vmem:[%s497 + $0x70] sm:$0xf]
        %v1903 = vld [vmem:[%s497 + $0x74] sm:$0xf]
        %v1904 = vld [vmem:[%s497 + $0x78] sm:$0xf]
        %v1905 = vld [vmem:[%s497 + $0x7c] sm:$0xf]
        %v1906 = vld [vmem:[%s497 + $0x80] sm:$0xf]
        %v1907 = vld [vmem:[%s497 + $0x84] sm:$0xf]
        %v1908 = vld [vmem:[%s497 + $0x88] sm:$0xf]
        %v1909 = vld [vmem:[%s497 + $0x8c] sm:$0xf]
        %v1910 = vld [vmem:[%s497 + $0x90] sm:$0xf]
        %v1911 = vld [vmem:[%s497 + $0x94] sm:$0xf]
        %v1912 = vld [vmem:[%s497 + $0x98] sm:$0xf]
        %v1913 = vld [vmem:[%s497 + $0x9c] sm:$0xf]
        %v1914 = vld [vmem:[%s497 + $0xa0] sm:$0xf]
        %v1915 = vld [vmem:[%s497 + $0xa4] sm:$0xf]
        %v1916 = vld [vmem:[%s497 + $0xa8] sm:$0xf]
        %v1917 = vld [vmem:[%s497 + $0xac] sm:$0xf]
        %v1918 = vld [vmem:[%s497 + $0xb0] sm:$0xf]
        %v1919 = vld [vmem:[%s497 + $0xb4] sm:$0xf]
        %v1920 = vld [vmem:[%s497 + $0xb8] sm:$0xf]
        %v1921 = vld [vmem:[%s497 + $0xbc] sm:$0xf]
        %v1922 = vld [vmem:[%s497 + $0xc0] sm:$0xf]
        %v1923 = vld [vmem:[%s497 + $0xc4] sm:$0xf]
        %v1924 = vld [vmem:[%s497 + $0xc8] sm:$0xf]
        %v1925 = vld [vmem:[%s497 + $0xcc] sm:$0xf]
        %v1926 = vld [vmem:[%s497 + $0xd0] sm:$0xf]
        %v1927 = vld [vmem:[%s497 + $0xd4] sm:$0xf]
        %v1928 = vld [vmem:[%s497 + $0xd8] sm:$0xf]
        %v1929 = vld [vmem:[%s497 + $0xdc] sm:$0xf]
        %v1930 = vld [vmem:[%s497 + $0xe0] sm:$0xf]
        %v1931 = vld [vmem:[%s497 + $0xe4] sm:$0xf]
        %v1932 = vld [vmem:[%s497 + $0xe8] sm:$0xf]
        %v1933 = vld [vmem:[%s497 + $0xec] sm:$0xf]
        %v1934 = vld [vmem:[%s497 + $0xf0] sm:$0xf]
        %v1935 = vld [vmem:[%s497 + $0xf4] sm:$0xf]
        %v1936 = vld [vmem:[%s497 + $0xf8] sm:$0xf]
        %v1937 = vld [vmem:[%s497 + $0xfc] sm:$0xf]
        %v1938 = vperm.slane %v642, 3
        %v2003 = vunpack.c.l.b16 %v1874
        %v2004 = vunpack.c.l.b16 %v1875
        %v2005 = vunpack.c.l.b16 %v1876
        %v2006 = vunpack.c.l.b16 %v1877
        %v2007 = vunpack.c.l.b16 %v1878
        %v2008 = vunpack.c.l.b16 %v1879
        %v2009 = vunpack.c.l.b16 %v1880
        %v2010 = vunpack.c.l.b16 %v1881
        %v2011 = vunpack.c.l.b16 %v1882
        %v2012 = vunpack.c.l.b16 %v1883
        %v2013 = vunpack.c.l.b16 %v1884
        %v2014 = vunpack.c.l.b16 %v1885
        %v2015 = vunpack.c.l.b16 %v1886
        %v2016 = vunpack.c.l.b16 %v1887
        %v2017 = vunpack.c.l.b16 %v1888
        %v2018 = vunpack.c.l.b16 %v1889
        %v2019 = vunpack.c.l.b16 %v1890
        %v2020 = vunpack.c.l.b16 %v1891
        %v2021 = vunpack.c.l.b16 %v1892
        %v2022 = vunpack.c.l.b16 %v1893
        %v2023 = vunpack.c.l.b16 %v1894
        %v2024 = vunpack.c.l.b16 %v1895
        %v2025 = vunpack.c.l.b16 %v1896
        %v2026 = vunpack.c.l.b16 %v1897
        %v2027 = vunpack.c.l.b16 %v1898
        %v2028 = vunpack.c.l.b16 %v1899
        %v2029 = vunpack.c.l.b16 %v1900
        %v2030 = vunpack.c.l.b16 %v1901
        %v2031 = vunpack.c.l.b16 %v1902
        %v2032 = vunpack.c.l.b16 %v1903
        %v2033 = vunpack.c.l.b16 %v1904
        %v2034 = vunpack.c.l.b16 %v1905
        %v2035 = vunpack.c.l.b16 %v1906
        %v2036 = vunpack.c.l.b16 %v1907
        %v2037 = vunpack.c.l.b16 %v1908
        %v2038 = vunpack.c.l.b16 %v1909
        %v2039 = vunpack.c.l.b16 %v1910
        %v2040 = vunpack.c.l.b16 %v1911
        %v2041 = vunpack.c.l.b16 %v1912
        %v2042 = vunpack.c.l.b16 %v1913
        %v2043 = vunpack.c.l.b16 %v1914
        %v2044 = vunpack.c.l.b16 %v1915
        %v2045 = vunpack.c.l.b16 %v1916
        %v2046 = vunpack.c.l.b16 %v1917
        %v2047 = vunpack.c.l.b16 %v1918
        %v2048 = vunpack.c.l.b16 %v1919
        %v2049 = vunpack.c.l.b16 %v1920
        %v2050 = vunpack.c.l.b16 %v1921
        %v2051 = vunpack.c.l.b16 %v1922
        %v2052 = vunpack.c.l.b16 %v1923
        %v2053 = vunpack.c.l.b16 %v1924
        %v2054 = vunpack.c.l.b16 %v1925
        %v2055 = vunpack.c.l.b16 %v1926
        %v2056 = vunpack.c.l.b16 %v1927
        %v2057 = vunpack.c.l.b16 %v1928
        %v2058 = vunpack.c.l.b16 %v1929
        %v2059 = vunpack.c.l.b16 %v1930
        %v2060 = vunpack.c.l.b16 %v1931
        %v2061 = vunpack.c.l.b16 %v1932
        %v2062 = vunpack.c.l.b16 %v1933
        %v2063 = vunpack.c.l.b16 %v1934
        %v2064 = vunpack.c.l.b16 %v1935
        %v2065 = vunpack.c.l.b16 %v1936
        %v2066 = vunpack.c.l.b16 %v1937
        %v2067 = vpack.c.b16 %v2004, %v2003
        %v2068 = vpack.c.b16 %v2006, %v2005
        %v2069 = vpack.c.b16 %v2008, %v2007
        %v2070 = vpack.c.b16 %v2010, %v2009
        %v2071 = vpack.c.b16 %v2012, %v2011
        %v2072 = vpack.c.b16 %v2014, %v2013
        %v2073 = vpack.c.b16 %v2016, %v2015
        %v2074 = vpack.c.b16 %v2018, %v2017
        %v2075 = vpack.c.b16 %v2020, %v2019
        %v2076 = vpack.c.b16 %v2022, %v2021
        %v2077 = vpack.c.b16 %v2024, %v2023
        %v2078 = vpack.c.b16 %v2026, %v2025
        %v2079 = vpack.c.b16 %v2028, %v2027
        %v2080 = vpack.c.b16 %v2030, %v2029
        %v2081 = vpack.c.b16 %v2032, %v2031
        %v2082 = vpack.c.b16 %v2034, %v2033
        %v2083 = vpack.c.b16 %v2036, %v2035
        %v2084 = vpack.c.b16 %v2038, %v2037
        %v2085 = vpack.c.b16 %v2040, %v2039
        %v2086 = vpack.c.b16 %v2042, %v2041
        %v2087 = vpack.c.b16 %v2044, %v2043
        %v2088 = vpack.c.b16 %v2046, %v2045
        %v2089 = vpack.c.b16 %v2048, %v2047
        %v2090 = vpack.c.b16 %v2050, %v2049
        %v2091 = vpack.c.b16 %v2052, %v2051
        %v2092 = vpack.c.b16 %v2054, %v2053
        %v2093 = vpack.c.b16 %v2056, %v2055
        %v2094 = vpack.c.b16 %v2058, %v2057
        %v2095 = vpack.c.b16 %v2060, %v2059
        %v2096 = vpack.c.b16 %v2062, %v2061
        %v2097 = vpack.c.b16 %v2064, %v2063
        %v2098 = vpack.c.b16 %v2066, %v2065
        %2131 = vmatpush.bf16.msra.mxu0 %v2074
        %2132 = vmatpush.bf16.msra.mxu0 %v2073
        %2133 = vmatpush.bf16.msra.mxu0 %v2072
        %2134 = vmatpush.bf16.msra.mxu0 %v2071
        %2135 = vmatpush.bf16.msra.mxu0 %v2070
        %2136 = vmatpush.bf16.msra.mxu0 %v2069
        %2137 = vmatpush.bf16.msra.mxu0 %v2068
        %2138 = vmatpush.bf16.msra.mxu0 %v2067
        %2139 = vmatmul.bf16.gmra.mxu0 %v1870
        %v2140 = vpop.f32.mrf.mxu0
        %v2141 = vadd.f32 %v1938, %v2140
        %v2142 = vpop.f32.mrf.mxu0
        %v2143 = vadd.f32 %v1938, %v2142
        %2144 = vdwg.mxu0
        %2145 = vmatpush.bf16.msra.mxu0 %v2082
        %2146 = vmatpush.bf16.msra.mxu0 %v2081
        %2147 = vmatpush.bf16.msra.mxu0 %v2080
        %2148 = vmatpush.bf16.msra.mxu0 %v2079
        %2149 = vmatpush.bf16.msra.mxu0 %v2078
        %2150 = vmatpush.bf16.msra.mxu0 %v2077
        %2151 = vmatpush.bf16.msra.mxu0 %v2076
        %2152 = vmatpush.bf16.msra.mxu0 %v2075
        %2153 = vmatmul.bf16.gmra.mxu0 %v1871
        %v2154 = vpop.f32.mrf.mxu0
        %v2155 = vadd.f32 %v2141, %v2154
        %v2156 = vpop.f32.mrf.mxu0
        %v2157 = vadd.f32 %v2143, %v2156
        %2158 = vdwg.mxu0
        %2159 = vmatpush.bf16.msra.mxu0 %v2090
        %2160 = vmatpush.bf16.msra.mxu0 %v2089
        %2161 = vmatpush.bf16.msra.mxu0 %v2088
        %2162 = vmatpush.bf16.msra.mxu0 %v2087
        %2163 = vmatpush.bf16.msra.mxu0 %v2086
        %2164 = vmatpush.bf16.msra.mxu0 %v2085
        %2165 = vmatpush.bf16.msra.mxu0 %v2084
        %2166 = vmatpush.bf16.msra.mxu0 %v2083
        %2167 = vmatmul.bf16.gmra.mxu0 %v1872
        %v2168 = vpop.f32.mrf.mxu0
        %v2169 = vadd.f32 %v2155, %v2168
        %v2170 = vpop.f32.mrf.mxu0
        %v2171 = vadd.f32 %v2157, %v2170
        %2172 = vdwg.mxu0
        %2173 = vmatpush.bf16.msra.mxu0 %v2098
        %2174 = vmatpush.bf16.msra.mxu0 %v2097
        %2175 = vmatpush.bf16.msra.mxu0 %v2096
        %2176 = vmatpush.bf16.msra.mxu0 %v2095
        %2177 = vmatpush.bf16.msra.mxu0 %v2094
        %2178 = vmatpush.bf16.msra.mxu0 %v2093
        %2179 = vmatpush.bf16.msra.mxu0 %v2092
        %2180 = vmatpush.bf16.msra.mxu0 %v2091
        %2181 = vmatmul.bf16.gmra.mxu0 %v1873
        %v2182 = vpop.f32.mrf.mxu0
        %v2183 = vadd.f32 %v2169, %v2182
        %v2184 = vpop.f32.mrf.mxu0
        %v2185 = vadd.f32 %v2171, %v2184
        %2186 = vdwg.mxu0
        %v2187 = vadd.f32 %v1537, %v2183
        %v2188 = vadd.f32 %v1538, %v2185
        %2189 = vadd.xlane.f32.xlu0 %v2187
        %v2190 = vpop.xlane.xlu0 %2189
        %2191 = vadd.xlane.f32.xlu0 %v2188
        %v2192 = vpop.xlane.xlu0 %2191
        %v2193 = vmul.f32 %v2190, %v1496
        %v2194 = vmul.f32 %v2192, %v1496
        %v2195 = vsub.f32 %v2187, %v2193
        %v2196 = vsub.f32 %v2188, %v2194
        %v2197 = vmul.f32 %v2195, %v2195
        %v2198 = vmul.f32 %v2196, %v2196
        %2199 = vadd.xlane.f32.xlu0 %v2197
        %v2200 = vpop.xlane.xlu0 %2199
        %2201 = vadd.xlane.f32.xlu0 %v2198
        %v2202 = vpop.xlane.xlu0 %2201
        %v2203 = vmul.f32 %v2200, %v1496
        %v2204 = vmul.f32 %v2202, %v1496
        %v2205 = vadd.f32 %v2203, 1e-12
        %v2206 = vadd.f32 %v2204, 1e-12
        %v2207 = vrsqrt.pop %v2205
        %v2208 = vmul.f32 %v2207, %v2205
        %v2209 = vmul.f32 %v2208, %v2207
        %v2210 = vmul.f32 0.5, %v2209
        %v2211 = vsub.f32 1.5, %v2210
        %v2212 = vmul.f32 %v2207, %v2211
        %vm2213 = vweird.f32 %v2205
        %vm2214 = vweird.f32 %v2207
        %vm2215 = vmor %vm2213, %vm2214
        %v2216 = vsel %vm2215, %v2207, %v2212
        %v2217 = vrsqrt.pop %v2206
        %v2218 = vmul.f32 %v2217, %v2206
        %v2219 = vmul.f32 %v2218, %v2217
        %v2220 = vmul.f32 0.5, %v2219
        %v2221 = vsub.f32 1.5, %v2220
        %v2222 = vmul.f32 %v2217, %v2221
        %vm2223 = vweird.f32 %v2206
        %vm2224 = vweird.f32 %v2217
        %vm2225 = vmor %vm2223, %vm2224
        %v2226 = vsel %vm2225, %v2217, %v2222
        %v2227 = vmul.f32 %v2195, %v2216
        %v2228 = vmul.f32 %v2196, %v2226
        %v2229 = vperm.slane %v642, 4
        %v2230 = vmul.f32 %v2227, %v2229
        %v2231 = vmul.f32 %v2228, %v2229
        %v2232 = vperm.slane %v642, 5
        %v2233 = vadd.f32 %v2230, %v2232
        %v2234 = vadd.f32 %v2231, %v2232
        %2235 = vst [vmem:[#allocation13] sm:$0xff] %v2233
        %2236 = vst [vmem:[#allocation13 + $0x8] sm:$0xff] %v2234
        // Predicated region
        $region89: #{tpu_custom_call.1} parent=59 // pred_check
          %p2237 = pneg %p290
        $region90: #{tpu_custom_call.1} parent=59 // pred_check_branch
          %2239 = sbr.rel (%p2237) target = $region92
        $region91: #{tpu_custom_call.1} parent=59 // pred_region
          %2241 = vsyncadd [#allocation4], 0
          %s2242 = sshll.u32 [#allocation13], 4
          %s2243 = int_to_ptr.vmem [resolvable:$true] %s2242
          %s2244 = sshll.u32 %s10, 4
          %s2245 = int_to_ptr.hbm [resolvable:$true] %s2244
          %2250 = dma.vmem_to_hbm [thread:$0]  %s2243, 256, %s2245, [#allocation4], 128, 128, 8
        $region92: #{tpu_custom_call.1} parent=59 // pred_fallthru
          _
        // Predicated region
        $region93: #{tpu_custom_call.1} parent=59 // pred_check
          %p2251 = pneg %p290
        $region94: #{tpu_custom_call.1} parent=59 // pred_check_branch
          %2253 = sbr.rel (%p2251) target = $region96
        $region95: #{tpu_custom_call.1} parent=59 // pred_region
          %2255 = dma.done [#allocation4], 256
        $region96: #{tpu_custom_call.1} parent=59 // pred_fallthru
          _
      $region60: #{tpu_custom_call.1} parent=5 // pred_fallthru
        _
      %p2256 = scmp.le.s32.totalorder 2, %s27
      // Predicated region
      $region97: #{tpu_custom_call.1} parent=5 // pred_check
        %p2257 = pneg %p2256
      $region98: #{tpu_custom_call.1} parent=5 // pred_check_branch
        %2259 = sbr.rel (%p2257) target = $region100
      $region99: #{tpu_custom_call.1} parent=5 // pred_region
        %s2260 = ssub.s32 %s27, 2
      $region100: #{tpu_custom_call.1} parent=5 // pred_fallthru
        _
    $region6: #{tpu_custom_call.1} parent=1 // loop_footer
      %s31 = sadd.s32 1, %s27
    $region7: #{tpu_custom_call.1} parent=1 // loop_footer_branch
      %26 = sbr.rel target = $region3
    $region8: #{tpu_custom_call.1} parent=1 // loop_exit
      _
    %2261 = vsyncpa [#allocation3], 1
    %s2262 = scalar_lea.sflag [#allocation3], 1
    %2263 = vsyncpa %s2262, 1
    %2264 = vsyncpa [#allocation6], 1
    %s2265 = scalar_lea.sflag [#allocation6], 1
    %2266 = vsyncpa %s2265, 1
    %2267 = vsyncpa [#allocation9], 1
    %s2268 = scalar_lea.sflag [#allocation9], 1
    %2269 = vsyncpa %s2268, 1
    %2270 = vsyncpa [#allocation12], 1
    %s2271 = scalar_lea.sflag [#allocation12], 1
    %2272 = vsyncpa %s2271, 1
    %2273 = vsyncpa [#allocation4], 1
    %s2274 = scalar_lea.sflag [#allocation4], 1
    %2275 = vsyncpa %s2274, 1

</llo_original>
